<compile_context>
chip_gen: v7x
topology: tpu7x:2x2x1
jax: 0.10.0
libtpu: 0.0.40
codegen_flags: <defaults>
</compile_context>

<pallas_src>
import math
import functools

import jax
import jax.numpy as jnp
from jax.experimental import pallas as pl
from jax.experimental.pallas import tpu as pltpu


def _mha_kernel(x_ref, wq_ref, wk_ref, wv_ref, bq_ref, bk_ref, bv_ref,
                wo_ref, bo_ref, o_ref, *, num_heads, head_dim):
    bb, S, H = x_ref.shape
    M = bb * S

    # Fold batch into the matmul M dimension (leading-dims-only reshape).
    x = x_ref[...].reshape(M, H).astype(jnp.bfloat16)            # (M, H) bf16

    # Three separate Q/K/V projections (no fused (M,3H) slab -> no non-128-
    # aligned lane splits).  bf16 operands, f32 accumulate, bias in f32,
    # single cast back to bf16.  The softmax scale is pre-folded into wq/bq.
    def proj(w_ref, b_ref):
        r = jnp.dot(x, w_ref[...], preferred_element_type=jnp.float32) + b_ref[...]
        return r.astype(jnp.bfloat16).reshape(bb, S, H)          # (bb, S, H) bf16

    q = proj(wq_ref, bq_ref)
    k = proj(wk_ref, bk_ref)
    v = proj(wv_ref, bv_ref)

    # Per-head attention with the output projection folded in: accumulate
    # y += ctx_h @ Wo[h] instead of concatenating head contexts into a scratch
    # slab (removes masked 8-lane scratch stores + the full reload/re-cast).
    y = jnp.zeros((M, H), jnp.float32)
    # TODO(synk): for nh >= 12 replace this static unroll with lax.fori_loop /
    # a batched-head einsum to bound vreg live ranges.
    for h in range(num_heads):
        sl = slice(h * head_dim, (h + 1) * head_dim)
        qh, kh, vh = q[:, :, sl], k[:, :, sl], v[:, :, sl]       # (bb, S, d) bf16

        s = jnp.einsum('bqd,bkd->bqk', qh, kh,
                       preferred_element_type=jnp.float32)       # (bb, S, S) f32
        m = jnp.max(s, axis=-1, keepdims=True)
        e = jnp.exp(s - m)
        p = e * pl.reciprocal(jnp.sum(e, axis=-1, keepdims=True), approx=True)
        # TODO(synk): attention-probs dropout omitted (identity in eval mode).

        ctx = jnp.einsum('bqk,bkd->bqd', p.astype(jnp.bfloat16), vh,
                         preferred_element_type=jnp.float32)     # (bb, S, d) f32
        y = y + jnp.dot(ctx.reshape(M, head_dim).astype(jnp.bfloat16),
                        wo_ref[h], preferred_element_type=jnp.float32)

    y = y + bo_ref[...]
    # TODO(synk): output dropout omitted (identity in eval mode).
    o_ref[...] = y.reshape(bb, S, H).astype(o_ref.dtype)


def faster_mha(x, w_qkv, b_qkv, w_out, b_out, *, num_heads, batch_block=None):
    """x: (B, S, H) float32. Weights in PyTorch Linear convention (out, in)."""
    B, S, H = x.shape
    head_dim = H // num_heads
    scale = 1.0 / math.sqrt(head_dim)

    # Default tiling: >=2 grid steps (v7x dual-TC sharding + pipelining), and
    # keep the per-step input block around <=2 MiB so double-buffering can
    # actually hide the HBM DMA.
    if batch_block is None:
        bb = max(1, B // 2)
        while B % bb:
            bb -= 1
        while bb > 1 and bb * S * H * 4 > (2 << 20):
            bb //= 2
            while B % bb:
                bb -= 1
    else:
        bb = min(batch_block, B)
    assert B % bb == 0, "batch_block must divide batch size"

    # Weight prep (trace-time, outside the kernel):
    #  * split the fused torch (3H, H) QKV weight into three (in, out) = (H, H)
    #    matrices; fold the softmax scale into the Q weight and bias.
    #  * output weight transposed to (in, out) and reshaped head-major
    #    (nh, d, H) so the kernel indexes heads on the leading axis.
    wq = (jnp.transpose(w_qkv[0 * H:1 * H, :]) * scale).astype(jnp.bfloat16)
    wk = jnp.transpose(w_qkv[1 * H:2 * H, :]).astype(jnp.bfloat16)
    wv = jnp.transpose(w_qkv[2 * H:3 * H, :]).astype(jnp.bfloat16)
    bq = (b_qkv[0 * H:1 * H] * scale).reshape(1, H).astype(jnp.float32)
    bk = b_qkv[1 * H:2 * H].reshape(1, H).astype(jnp.float32)
    bv = b_qkv[2 * H:3 * H].reshape(1, H).astype(jnp.float32)
    wo = jnp.transpose(w_out).reshape(num_heads, head_dim, H).astype(jnp.bfloat16)
    bo = b_out.reshape(1, H).astype(jnp.float32)

    kernel = functools.partial(_mha_kernel, num_heads=num_heads, head_dim=head_dim)

    return pl.pallas_call(
        kernel,
        out_shape=jax.ShapeDtypeStruct((B, S, H), x.dtype),
        grid_spec=pltpu.PrefetchScalarGridSpec(
            num_scalar_prefetch=0,
            grid=(B // bb,),
            in_specs=[
                pl.BlockSpec((bb, S, H), lambda i: (i, 0, 0)),            # x
                pl.BlockSpec((H, H), lambda i: (0, 0)),                   # wq
                pl.BlockSpec((H, H), lambda i: (0, 0)),                   # wk
                pl.BlockSpec((H, H), lambda i: (0, 0)),                   # wv
                pl.BlockSpec((1, H), lambda i: (0, 0)),                   # bq
                pl.BlockSpec((1, H), lambda i: (0, 0)),                   # bk
                pl.BlockSpec((1, H), lambda i: (0, 0)),                   # bv
                pl.BlockSpec((num_heads, head_dim, H), lambda i: (0, 0, 0)),  # wo
                pl.BlockSpec((1, H), lambda i: (0, 0)),                   # bo
            ],
            out_specs=pl.BlockSpec((bb, S, H), lambda i: (i, 0, 0)),
        ),
        compiler_params=pltpu.CompilerParams(
            dimension_semantics=("parallel",),
            vmem_limit_bytes=32 * 1024 * 1024),
    )(x, wq, wk, wv, bq, bk, bv, wo, bo)


def _reference_mha(x, w_qkv, b_qkv, w_out, b_out, *, num_heads):
    """Pure-JAX (f32) replica of the PyTorch forward (dropout = identity)."""
    B, S, H = x.shape
    d = H // num_heads
    qkv = jnp.einsum('bsh,oh->bso', x, w_qkv) + b_qkv
    q, k, v = jnp.split(qkv, 3, axis=-1)

    def heads(t):
        return t.reshape(B, S, num_heads, d).transpose(0, 2, 1, 3)

    q, k, v = heads(q), heads(k), heads(v)
    scores = jnp.einsum('bhqd,bhkd->bhqk', q, k) / math.sqrt(d)
    probs = jax.nn.softmax(scores, axis=-1)
    out = jnp.einsum('bhqk,bhkd->bhqd', probs, v)
    out = out.transpose(0, 2, 1, 3).reshape(B, S, H)
    return jnp.einsum('bsh,oh->bso', out, w_out) + b_out


if __name__ == "__main__":
    # Config implied by the module: hidden_size=32, num_attention_heads=4,
    # qkv_bias=True, dropout probs -> identity at inference.
    B, S, H = 2, 8, 32
    NUM_HEADS = 4

    key = jax.random.PRNGKey(0)
    kx, kw1, kb1, kw2, kb2 = jax.random.split(key, 5)

    x = jax.random.normal(kx, (B, S, H), dtype=jnp.float32)
    # PyTorch Linear shapes: weight (out, in), bias (out,).
    w_qkv = jax.random.normal(kw1, (3 * H, H), dtype=jnp.float32) * 0.05
    b_qkv = jax.random.normal(kb1, (3 * H,), dtype=jnp.float32) * 0.05
    w_out = jax.random.normal(kw2, (H, H), dtype=jnp.float32) * 0.05
    b_out = jax.random.normal(kb2, (H,), dtype=jnp.float32) * 0.05

    y = faster_mha(x, w_qkv, b_qkv, w_out, b_out, num_heads=NUM_HEADS)
    y = jax.block_until_ready(y)

    y_ref = _reference_mha(x, w_qkv, b_qkv, w_out, b_out, num_heads=NUM_HEADS)
    # Tolerance loosened for bf16 MXU operands + approx reciprocal.
    assert jnp.allclose(y, y_ref, atol=2e-2, rtol=2e-2), "mismatch vs reference"

    print("KERNEL_OK")
</pallas_src>

<mosaic_0001>
module attributes {stable_mosaic.version = 11 : i64} {
  func.func @_mha_kernel(%arg0: i32, %arg1: memref<1x8x32xf32, #tpu.memory_space<vmem>>, %arg2: memref<32x32xbf16, #tpu.memory_space<vmem>>, %arg3: memref<32x32xbf16, #tpu.memory_space<vmem>>, %arg4: memref<32x32xbf16, #tpu.memory_space<vmem>>, %arg5: memref<1x32xf32, #tpu.memory_space<vmem>>, %arg6: memref<1x32xf32, #tpu.memory_space<vmem>>, %arg7: memref<1x32xf32, #tpu.memory_space<vmem>>, %arg8: memref<4x8x32xbf16, #tpu.memory_space<vmem>>, %arg9: memref<1x32xf32, #tpu.memory_space<vmem>>, %arg10: memref<1x8x32xf32, #tpu.memory_space<vmem>>) attributes {dimension_semantics = [#tpu.dimension_semantics<parallel>], iteration_bounds = array<i64: 2>, scalar_prefetch = 0 : i64, scratch_operands = 0 : i64, tpu.core_type = #tpu.core_type<tc>, window_params = [{transform_indices = @transform_0, window_bounds = array<i64: 1, 8, 32>}, {pipeline_mode = #tpu.pipeline_mode<synchronous>, transform_indices = @transform_1, window_bounds = array<i64: 32, 32>}, {pipeline_mode = #tpu.pipeline_mode<synchronous>, transform_indices = @transform_2, window_bounds = array<i64: 32, 32>}, {pipeline_mode = #tpu.pipeline_mode<synchronous>, transform_indices = @transform_3, window_bounds = array<i64: 32, 32>}, {pipeline_mode = #tpu.pipeline_mode<synchronous>, transform_indices = @transform_4, window_bounds = array<i64: 1, 32>}, {pipeline_mode = #tpu.pipeline_mode<synchronous>, transform_indices = @transform_5, window_bounds = array<i64: 1, 32>}, {pipeline_mode = #tpu.pipeline_mode<synchronous>, transform_indices = @transform_6, window_bounds = array<i64: 1, 32>}, {pipeline_mode = #tpu.pipeline_mode<synchronous>, transform_indices = @transform_7, window_bounds = array<i64: 4, 8, 32>}, {pipeline_mode = #tpu.pipeline_mode<synchronous>, transform_indices = @transform_8, window_bounds = array<i64: 1, 32>}, {transform_indices = @transform_9, window_bounds = array<i64: 1, 8, 32>}]} {
    %c0 = arith.constant 0 : index
    %c0_0 = arith.constant 0 : index
    %c0_1 = arith.constant 0 : index
    %0 = vector.load %arg1[%c0, %c0_0, %c0_1] : memref<1x8x32xf32, #tpu.memory_space<vmem>>, vector<1x8x32xf32>
    %1 = vector.shape_cast %0 : vector<1x8x32xf32> to vector<8x32xf32>
    %2 = arith.truncf %1 : vector<8x32xf32> to vector<8x32xbf16>
    %c0_2 = arith.constant 0 : index
    %c0_3 = arith.constant 0 : index
    %3 = vector.load %arg2[%c0_2, %c0_3] : memref<32x32xbf16, #tpu.memory_space<vmem>>, vector<32x32xbf16>
    %cst = arith.constant dense<0.000000e+00> : vector<8x32xf32>
    %4 = tpu.matmul %2, %3, %cst {dimension_numbers = #tpu.dot_dimension_numbers<[1], [0], [0], [1], [0, 0, 1, 1], [], []>} : vector<8x32xbf16>, vector<32x32xbf16>, vector<8x32xf32> -> vector<8x32xf32>
    %c0_4 = arith.constant 0 : index
    %c0_5 = arith.constant 0 : index
    %5 = vector.load %arg5[%c0_4, %c0_5] : memref<1x32xf32, #tpu.memory_space<vmem>>, vector<1x32xf32>
    %6 = vector.broadcast %5 : vector<1x32xf32> to vector<8x32xf32>
    %7 = arith.addf %4, %6 : vector<8x32xf32>
    %8 = arith.truncf %7 : vector<8x32xf32> to vector<8x32xbf16>
    %9 = vector.shape_cast %8 : vector<8x32xbf16> to vector<1x8x32xbf16>
    %c0_6 = arith.constant 0 : index
    %c0_7 = arith.constant 0 : index
    %10 = vector.load %arg3[%c0_6, %c0_7] : memref<32x32xbf16, #tpu.memory_space<vmem>>, vector<32x32xbf16>
    %cst_8 = arith.constant dense<0.000000e+00> : vector<8x32xf32>
    %11 = tpu.matmul %2, %10, %cst_8 {dimension_numbers = #tpu.dot_dimension_numbers<[1], [0], [0], [1], [0, 0, 1, 1], [], []>} : vector<8x32xbf16>, vector<32x32xbf16>, vector<8x32xf32> -> vector<8x32xf32>
    %c0_9 = arith.constant 0 : index
    %c0_10 = arith.constant 0 : index
    %12 = vector.load %arg6[%c0_9, %c0_10] : memref<1x32xf32, #tpu.memory_space<vmem>>, vector<1x32xf32>
    %13 = vector.broadcast %12 : vector<1x32xf32> to vector<8x32xf32>
    %14 = arith.addf %11, %13 : vector<8x32xf32>
    %15 = arith.truncf %14 : vector<8x32xf32> to vector<8x32xbf16>
    %16 = vector.shape_cast %15 : vector<8x32xbf16> to vector<1x8x32xbf16>
    %c0_11 = arith.constant 0 : index
    %c0_12 = arith.constant 0 : index
    %17 = vector.load %arg4[%c0_11, %c0_12] : memref<32x32xbf16, #tpu.memory_space<vmem>>, vector<32x32xbf16>
    %cst_13 = arith.constant dense<0.000000e+00> : vector<8x32xf32>
    %18 = tpu.matmul %2, %17, %cst_13 {dimension_numbers = #tpu.dot_dimension_numbers<[1], [0], [0], [1], [0, 0, 1, 1], [], []>} : vector<8x32xbf16>, vector<32x32xbf16>, vector<8x32xf32> -> vector<8x32xf32>
    %c0_14 = arith.constant 0 : index
    %c0_15 = arith.constant 0 : index
    %19 = vector.load %arg7[%c0_14, %c0_15] : memref<1x32xf32, #tpu.memory_space<vmem>>, vector<1x32xf32>
    %20 = vector.broadcast %19 : vector<1x32xf32> to vector<8x32xf32>
    %21 = arith.addf %18, %20 : vector<8x32xf32>
    %22 = arith.truncf %21 : vector<8x32xf32> to vector<8x32xbf16>
    %23 = vector.shape_cast %22 : vector<8x32xbf16> to vector<1x8x32xbf16>
    %cst_16 = arith.constant 0.000000e+00 : f32
    %24 = vector.broadcast %cst_16 : f32 to vector<8x32xf32>
    %25 = vector.extract_strided_slice %9 {offsets = [0, 0, 0], sizes = [1, 8, 8], strides = [1, 1, 1]} : vector<1x8x32xbf16> to vector<1x8x8xbf16>
    %26 = vector.extract_strided_slice %16 {offsets = [0, 0, 0], sizes = [1, 8, 8], strides = [1, 1, 1]} : vector<1x8x32xbf16> to vector<1x8x8xbf16>
    %27 = vector.extract_strided_slice %23 {offsets = [0, 0, 0], sizes = [1, 8, 8], strides = [1, 1, 1]} : vector<1x8x32xbf16> to vector<1x8x8xbf16>
    "tpu.trace_start"() <{level = 10 : i32, message = "bqd,bkd->bqk"}> : () -> ()
    %cst_17 = arith.constant dense<0.000000e+00> : vector<1x8x8xf32>
    %28 = tpu.matmul %25, %26, %cst_17 {dimension_numbers = #tpu.dot_dimension_numbers<[2], [2], [1], [1], [0, 0, 0, 1, 1, 1], [0], [0]>} : vector<1x8x8xbf16>, vector<1x8x8xbf16>, vector<1x8x8xf32> -> vector<1x8x8xf32>
    "tpu.trace_stop"() : () -> ()
    %cst_18 = arith.constant dense<0xFF800000> : vector<1x8xf32>
    %29 = vector.multi_reduction <maximumf>, %28, %cst_18 [2] : vector<1x8x8xf32> to vector<1x8xf32>
    %30 = vector.shape_cast %29 : vector<1x8xf32> to vector<1x8x1xf32>
    %31 = vector.broadcast %30 : vector<1x8x1xf32> to vector<1x8x8xf32>
    %32 = arith.subf %28, %31 : vector<1x8x8xf32>
    %33 = math.exp %32 : vector<1x8x8xf32>
    %cst_19 = arith.constant dense<0.000000e+00> : vector<1x8xf32>
    %34 = vector.multi_reduction <add>, %33, %cst_19 [2] : vector<1x8x8xf32> to vector<1x8xf32>
    %35 = vector.shape_cast %34 : vector<1x8xf32> to vector<1x8x1xf32>
    %36 = tpu.reciprocal %35 {approx = true} : vector<1x8x1xf32> -> vector<1x8x1xf32>
    %37 = vector.broadcast %36 : vector<1x8x1xf32> to vector<1x8x8xf32>
    %38 = arith.mulf %33, %37 : vector<1x8x8xf32>
    %39 = arith.truncf %38 : vector<1x8x8xf32> to vector<1x8x8xbf16>
    "tpu.trace_start"() <{level = 10 : i32, message = "bqk,bkd->bqd"}> : () -> ()
    %cst_20 = arith.constant dense<0.000000e+00> : vector<1x8x8xf32>
    %40 = tpu.matmul %39, %27, %cst_20 {dimension_numbers = #tpu.dot_dimension_numbers<[2], [1], [1], [2], [0, 0, 0, 1, 1, 2], [0], [0]>} : vector<1x8x8xbf16>, vector<1x8x8xbf16>, vector<1x8x8xf32> -> vector<1x8x8xf32>
    "tpu.trace_stop"() : () -> ()
    %41 = vector.shape_cast %40 : vector<1x8x8xf32> to vector<8x8xf32>
    %42 = arith.truncf %41 : vector<8x8xf32> to vector<8x8xbf16>
    %c0_21 = arith.constant 0 : index
    %c0_22 = arith.constant 0 : index
    %c0_23 = arith.constant 0 : index
    %43 = vector.load %arg8[%c0_21, %c0_22, %c0_23] : memref<4x8x32xbf16, #tpu.memory_space<vmem>>, vector<1x8x32xbf16>
    %44 = vector.shape_cast %43 : vector<1x8x32xbf16> to vector<8x32xbf16>
    %cst_24 = arith.constant dense<0.000000e+00> : vector<8x32xf32>
    %45 = tpu.matmul %42, %44, %cst_24 {dimension_numbers = #tpu.dot_dimension_numbers<[1], [0], [0], [1], [0, 0, 1, 1], [], []>} : vector<8x8xbf16>, vector<8x32xbf16>, vector<8x32xf32> -> vector<8x32xf32>
    %46 = arith.addf %24, %45 : vector<8x32xf32>
    %47 = vector.extract_strided_slice %9 {offsets = [0, 0, 8], sizes = [1, 8, 8], strides = [1, 1, 1]} : vector<1x8x32xbf16> to vector<1x8x8xbf16>
    %48 = vector.extract_strided_slice %16 {offsets = [0, 0, 8], sizes = [1, 8, 8], strides = [1, 1, 1]} : vector<1x8x32xbf16> to vector<1x8x8xbf16>
    %49 = vector.extract_strided_slice %23 {offsets = [0, 0, 8], sizes = [1, 8, 8], strides = [1, 1, 1]} : vector<1x8x32xbf16> to vector<1x8x8xbf16>
    "tpu.trace_start"() <{level = 10 : i32, message = "bqd,bkd->bqk"}> : () -> ()
    %cst_25 = arith.constant dense<0.000000e+00> : vector<1x8x8xf32>
    %50 = tpu.matmul %47, %48, %cst_25 {dimension_numbers = #tpu.dot_dimension_numbers<[2], [2], [1], [1], [0, 0, 0, 1, 1, 1], [0], [0]>} : vector<1x8x8xbf16>, vector<1x8x8xbf16>, vector<1x8x8xf32> -> vector<1x8x8xf32>
    "tpu.trace_stop"() : () -> ()
    %cst_26 = arith.constant dense<0xFF800000> : vector<1x8xf32>
    %51 = vector.multi_reduction <maximumf>, %50, %cst_26 [2] : vector<1x8x8xf32> to vector<1x8xf32>
    %52 = vector.shape_cast %51 : vector<1x8xf32> to vector<1x8x1xf32>
    %53 = vector.broadcast %52 : vector<1x8x1xf32> to vector<1x8x8xf32>
    %54 = arith.subf %50, %53 : vector<1x8x8xf32>
    %55 = math.exp %54 : vector<1x8x8xf32>
    %cst_27 = arith.constant dense<0.000000e+00> : vector<1x8xf32>
    %56 = vector.multi_reduction <add>, %55, %cst_27 [2] : vector<1x8x8xf32> to vector<1x8xf32>
    %57 = vector.shape_cast %56 : vector<1x8xf32> to vector<1x8x1xf32>
    %58 = tpu.reciprocal %57 {approx = true} : vector<1x8x1xf32> -> vector<1x8x1xf32>
    %59 = vector.broadcast %58 : vector<1x8x1xf32> to vector<1x8x8xf32>
    %60 = arith.mulf %55, %59 : vector<1x8x8xf32>
    %61 = arith.truncf %60 : vector<1x8x8xf32> to vector<1x8x8xbf16>
    "tpu.trace_start"() <{level = 10 : i32, message = "bqk,bkd->bqd"}> : () -> ()
    %cst_28 = arith.constant dense<0.000000e+00> : vector<1x8x8xf32>
    %62 = tpu.matmul %61, %49, %cst_28 {dimension_numbers = #tpu.dot_dimension_numbers<[2], [1], [1], [2], [0, 0, 0, 1, 1, 2], [0], [0]>} : vector<1x8x8xbf16>, vector<1x8x8xbf16>, vector<1x8x8xf32> -> vector<1x8x8xf32>
    "tpu.trace_stop"() : () -> ()
    %63 = vector.shape_cast %62 : vector<1x8x8xf32> to vector<8x8xf32>
    %64 = arith.truncf %63 : vector<8x8xf32> to vector<8x8xbf16>
    %c1 = arith.constant 1 : index
    %c0_29 = arith.constant 0 : index
    %c0_30 = arith.constant 0 : index
    %65 = vector.load %arg8[%c1, %c0_29, %c0_30] : memref<4x8x32xbf16, #tpu.memory_space<vmem>>, vector<1x8x32xbf16>
    %66 = vector.shape_cast %65 : vector<1x8x32xbf16> to vector<8x32xbf16>
    %cst_31 = arith.constant dense<0.000000e+00> : vector<8x32xf32>
    %67 = tpu.matmul %64, %66, %cst_31 {dimension_numbers = #tpu.dot_dimension_numbers<[1], [0], [0], [1], [0, 0, 1, 1], [], []>} : vector<8x8xbf16>, vector<8x32xbf16>, vector<8x32xf32> -> vector<8x32xf32>
    %68 = arith.addf %46, %67 : vector<8x32xf32>
    %69 = vector.extract_strided_slice %9 {offsets = [0, 0, 16], sizes = [1, 8, 8], strides = [1, 1, 1]} : vector<1x8x32xbf16> to vector<1x8x8xbf16>
    %70 = vector.extract_strided_slice %16 {offsets = [0, 0, 16], sizes = [1, 8, 8], strides = [1, 1, 1]} : vector<1x8x32xbf16> to vector<1x8x8xbf16>
    %71 = vector.extract_strided_slice %23 {offsets = [0, 0, 16], sizes = [1, 8, 8], strides = [1, 1, 1]} : vector<1x8x32xbf16> to vector<1x8x8xbf16>
    "tpu.trace_start"() <{level = 10 : i32, message = "bqd,bkd->bqk"}> : () -> ()
    %cst_32 = arith.constant dense<0.000000e+00> : vector<1x8x8xf32>
    %72 = tpu.matmul %69, %70, %cst_32 {dimension_numbers = #tpu.dot_dimension_numbers<[2], [2], [1], [1], [0, 0, 0, 1, 1, 1], [0], [0]>} : vector<1x8x8xbf16>, vector<1x8x8xbf16>, vector<1x8x8xf32> -> vector<1x8x8xf32>
    "tpu.trace_stop"() : () -> ()
    %cst_33 = arith.constant dense<0xFF800000> : vector<1x8xf32>
    %73 = vector.multi_reduction <maximumf>, %72, %cst_33 [2] : vector<1x8x8xf32> to vector<1x8xf32>
    %74 = vector.shape_cast %73 : vector<1x8xf32> to vector<1x8x1xf32>
    %75 = vector.broadcast %74 : vector<1x8x1xf32> to vector<1x8x8xf32>
    %76 = arith.subf %72, %75 : vector<1x8x8xf32>
    %77 = math.exp %76 : vector<1x8x8xf32>
    %cst_34 = arith.constant dense<0.000000e+00> : vector<1x8xf32>
    %78 = vector.multi_reduction <add>, %77, %cst_34 [2] : vector<1x8x8xf32> to vector<1x8xf32>
    %79 = vector.shape_cast %78 : vector<1x8xf32> to vector<1x8x1xf32>
    %80 = tpu.reciprocal %79 {approx = true} : vector<1x8x1xf32> -> vector<1x8x1xf32>
    %81 = vector.broadcast %80 : vector<1x8x1xf32> to vector<1x8x8xf32>
    %82 = arith.mulf %77, %81 : vector<1x8x8xf32>
    %83 = arith.truncf %82 : vector<1x8x8xf32> to vector<1x8x8xbf16>
    "tpu.trace_start"() <{level = 10 : i32, message = "bqk,bkd->bqd"}> : () -> ()
    %cst_35 = arith.constant dense<0.000000e+00> : vector<1x8x8xf32>
    %84 = tpu.matmul %83, %71, %cst_35 {dimension_numbers = #tpu.dot_dimension_numbers<[2], [1], [1], [2], [0, 0, 0, 1, 1, 2], [0], [0]>} : vector<1x8x8xbf16>, vector<1x8x8xbf16>, vector<1x8x8xf32> -> vector<1x8x8xf32>
    "tpu.trace_stop"() : () -> ()
    %85 = vector.shape_cast %84 : vector<1x8x8xf32> to vector<8x8xf32>
    %86 = arith.truncf %85 : vector<8x8xf32> to vector<8x8xbf16>
    %c2 = arith.constant 2 : index
    %c0_36 = arith.constant 0 : index
    %c0_37 = arith.constant 0 : index
    %87 = vector.load %arg8[%c2, %c0_36, %c0_37] : memref<4x8x32xbf16, #tpu.memory_space<vmem>>, vector<1x8x32xbf16>
    %88 = vector.shape_cast %87 : vector<1x8x32xbf16> to vector<8x32xbf16>
    %cst_38 = arith.constant dense<0.000000e+00> : vector<8x32xf32>
    %89 = tpu.matmul %86, %88, %cst_38 {dimension_numbers = #tpu.dot_dimension_numbers<[1], [0], [0], [1], [0, 0, 1, 1], [], []>} : vector<8x8xbf16>, vector<8x32xbf16>, vector<8x32xf32> -> vector<8x32xf32>
    %90 = arith.addf %68, %89 : vector<8x32xf32>
    %91 = vector.extract_strided_slice %9 {offsets = [0, 0, 24], sizes = [1, 8, 8], strides = [1, 1, 1]} : vector<1x8x32xbf16> to vector<1x8x8xbf16>
    %92 = vector.extract_strided_slice %16 {offsets = [0, 0, 24], sizes = [1, 8, 8], strides = [1, 1, 1]} : vector<1x8x32xbf16> to vector<1x8x8xbf16>
    %93 = vector.extract_strided_slice %23 {offsets = [0, 0, 24], sizes = [1, 8, 8], strides = [1, 1, 1]} : vector<1x8x32xbf16> to vector<1x8x8xbf16>
    "tpu.trace_start"() <{level = 10 : i32, message = "bqd,bkd->bqk"}> : () -> ()
    %cst_39 = arith.constant dense<0.000000e+00> : vector<1x8x8xf32>
    %94 = tpu.matmul %91, %92, %cst_39 {dimension_numbers = #tpu.dot_dimension_numbers<[2], [2], [1], [1], [0, 0, 0, 1, 1, 1], [0], [0]>} : vector<1x8x8xbf16>, vector<1x8x8xbf16>, vector<1x8x8xf32> -> vector<1x8x8xf32>
    "tpu.trace_stop"() : () -> ()
    %cst_40 = arith.constant dense<0xFF800000> : vector<1x8xf32>
    %95 = vector.multi_reduction <maximumf>, %94, %cst_40 [2] : vector<1x8x8xf32> to vector<1x8xf32>
    %96 = vector.shape_cast %95 : vector<1x8xf32> to vector<1x8x1xf32>
    %97 = vector.broadcast %96 : vector<1x8x1xf32> to vector<1x8x8xf32>
    %98 = arith.subf %94, %97 : vector<1x8x8xf32>
    %99 = math.exp %98 : vector<1x8x8xf32>
    %cst_41 = arith.constant dense<0.000000e+00> : vector<1x8xf32>
    %100 = vector.multi_reduction <add>, %99, %cst_41 [2] : vector<1x8x8xf32> to vector<1x8xf32>
    %101 = vector.shape_cast %100 : vector<1x8xf32> to vector<1x8x1xf32>
    %102 = tpu.reciprocal %101 {approx = true} : vector<1x8x1xf32> -> vector<1x8x1xf32>
    %103 = vector.broadcast %102 : vector<1x8x1xf32> to vector<1x8x8xf32>
    %104 = arith.mulf %99, %103 : vector<1x8x8xf32>
    %105 = arith.truncf %104 : vector<1x8x8xf32> to vector<1x8x8xbf16>
    "tpu.trace_start"() <{level = 10 : i32, message = "bqk,bkd->bqd"}> : () -> ()
    %cst_42 = arith.constant dense<0.000000e+00> : vector<1x8x8xf32>
    %106 = tpu.matmul %105, %93, %cst_42 {dimension_numbers = #tpu.dot_dimension_numbers<[2], [1], [1], [2], [0, 0, 0, 1, 1, 2], [0], [0]>} : vector<1x8x8xbf16>, vector<1x8x8xbf16>, vector<1x8x8xf32> -> vector<1x8x8xf32>
    "tpu.trace_stop"() : () -> ()
    %107 = vector.shape_cast %106 : vector<1x8x8xf32> to vector<8x8xf32>
    %108 = arith.truncf %107 : vector<8x8xf32> to vector<8x8xbf16>
    %c3 = arith.constant 3 : index
    %c0_43 = arith.constant 0 : index
    %c0_44 = arith.constant 0 : index
    %109 = vector.load %arg8[%c3, %c0_43, %c0_44] : memref<4x8x32xbf16, #tpu.memory_space<vmem>>, vector<1x8x32xbf16>
    %110 = vector.shape_cast %109 : vector<1x8x32xbf16> to vector<8x32xbf16>
    %cst_45 = arith.constant dense<0.000000e+00> : vector<8x32xf32>
    %111 = tpu.matmul %108, %110, %cst_45 {dimension_numbers = #tpu.dot_dimension_numbers<[1], [0], [0], [1], [0, 0, 1, 1], [], []>} : vector<8x8xbf16>, vector<8x32xbf16>, vector<8x32xf32> -> vector<8x32xf32>
    %112 = arith.addf %90, %111 : vector<8x32xf32>
    %c0_46 = arith.constant 0 : index
    %c0_47 = arith.constant 0 : index
    %113 = vector.load %arg9[%c0_46, %c0_47] : memref<1x32xf32, #tpu.memory_space<vmem>>, vector<1x32xf32>
    %114 = vector.broadcast %113 : vector<1x32xf32> to vector<8x32xf32>
    %115 = arith.addf %112, %114 : vector<8x32xf32>
    %116 = vector.shape_cast %115 : vector<8x32xf32> to vector<1x8x32xf32>
    %c0_48 = arith.constant 0 : index
    %c0_49 = arith.constant 0 : index
    %c0_50 = arith.constant 0 : index
    %117 = vector.load %arg10[%c0_48, %c0_49, %c0_50] : memref<1x8x32xf32, #tpu.memory_space<vmem>>, vector<1x8x32xf32>
    tpu.vector_store %arg10[%c0_48, %c0_49, %c0_50], %116 {strides = array<i32>} : memref<1x8x32xf32, #tpu.memory_space<vmem>>, vector<1x8x32xf32>,
    return
  }
  func.func @transform_0(%arg0: i32) -> (i32, i32, i32) {
    %c0_i32 = arith.constant 0 : i32
    %c0_i32_0 = arith.constant 0 : i32
    %c0_i32_1 = arith.constant 0 : i32
    return %arg0, %c0_i32, %c0_i32_0 : i32, i32, i32
  }
  func.func @transform_1(%arg0: i32) -> (i32, i32) {
    %c0_i32 = arith.constant 0 : i32
    %c0_i32_0 = arith.constant 0 : i32
    %c0_i32_1 = arith.constant 0 : i32
    return %c0_i32, %c0_i32_0 : i32, i32
  }
  func.func @transform_2(%arg0: i32) -> (i32, i32) {
    %c0_i32 = arith.constant 0 : i32
    %c0_i32_0 = arith.constant 0 : i32
    %c0_i32_1 = arith.constant 0 : i32
    return %c0_i32, %c0_i32_0 : i32, i32
  }
  func.func @transform_3(%arg0: i32) -> (i32, i32) {
    %c0_i32 = arith.constant 0 : i32
    %c0_i32_0 = arith.constant 0 : i32
    %c0_i32_1 = arith.constant 0 : i32
    return %c0_i32, %c0_i32_0 : i32, i32
  }
  func.func @transform_4(%arg0: i32) -> (i32, i32) {
    %c0_i32 = arith.constant 0 : i32
    %c0_i32_0 = arith.constant 0 : i32
    %c0_i32_1 = arith.constant 0 : i32
    return %c0_i32, %c0_i32_0 : i32, i32
  }
  func.func @transform_5(%arg0: i32) -> (i32, i32) {
    %c0_i32 = arith.constant 0 : i32
    %c0_i32_0 = arith.constant 0 : i32
    %c0_i32_1 = arith.constant 0 : i32
    return %c0_i32, %c0_i32_0 : i32, i32
  }
  func.func @transform_6(%arg0: i32) -> (i32, i32) {
    %c0_i32 = arith.constant 0 : i32
    %c0_i32_0 = arith.constant 0 : i32
    %c0_i32_1 = arith.constant 0 : i32
    return %c0_i32, %c0_i32_0 : i32, i32
  }
  func.func @transform_7(%arg0: i32) -> (i32, i32, i32) {
    %c0_i32 = arith.constant 0 : i32
    %c0_i32_0 = arith.constant 0 : i32
    %c0_i32_1 = arith.constant 0 : i32
    %c0_i32_2 = arith.constant 0 : i32
    return %c0_i32, %c0_i32_0, %c0_i32_1 : i32, i32, i32
  }
  func.func @transform_8(%arg0: i32) -> (i32, i32) {
    %c0_i32 = arith.constant 0 : i32
    %c0_i32_0 = arith.constant 0 : i32
    %c0_i32_1 = arith.constant 0 : i32
    return %c0_i32, %c0_i32_0 : i32, i32
  }
  func.func @transform_9(%arg0: i32) -> (i32, i32, i32) {
    %c0_i32 = arith.constant 0 : i32
    %c0_i32_0 = arith.constant 0 : i32
    %c0_i32_1 = arith.constant 0 : i32
    return %arg0, %c0_i32, %c0_i32_0 : i32, i32, i32
  }
}

</mosaic_0001>

<llo_original>
// kernel: tpu_custom_call.1
$region0: #{tpu_custom_call.1}
  #allocation0 [shape = 'u32[]', space=smem, size = 0x4, offset = 0x4, fixed_abs, tag = 'smem constant byte address 0x4 - core index']
  #allocation1 [shape = 'u32[144,128]{1,0:T(1,128)}', space=vmem, size = 0x12000, scoped, tag = 'internal scratch']
  %s0 = inlined_call_operand.hbm [shape: f32[2,8,32], index: 0, kind: input, shape index: {}]
  %s1 = inlined_call_operand.hbm [shape: bf16[32,32], index: 1, kind: input, shape index: {}]
  %s2 = inlined_call_operand.hbm [shape: bf16[32,32], index: 2, kind: input, shape index: {}]
  %s3 = inlined_call_operand.hbm [shape: bf16[32,32], index: 3, kind: input, shape index: {}]
  %s4 = inlined_call_operand.vmem [shape: f32[1,32], index: 4, kind: input, shape index: {}]
  %s5 = inlined_call_operand.vmem [shape: f32[1,32], index: 5, kind: input, shape index: {}]
  %s6 = inlined_call_operand.vmem [shape: f32[1,32], index: 6, kind: input, shape index: {}]
  %s7 = inlined_call_operand.vmem [shape: bf16[4,8,32], index: 7, kind: input, shape index: {}]
  %s8 = inlined_call_operand.vmem [shape: f32[1,32], index: 8, kind: input, shape index: {}]
  %s9 = inlined_call_operand.hbm [shape: f32[2,8,32], index: 9, kind: output, shape index: {}]
  %s10 = sld [smem:[#allocation0]]
  $region85: #{tpu_custom_call.1} parent=0
    _
  %s12 = ssub.s32 1, %s10
  %s13 = scalar_select 0, %s12, %s10
  $region1: #{tpu_custom_call.1} parent=0
    #allocation2 [shape = 'u8[8192]{0}', space=vmem, size = 0x2000, scoped, tag = 'input window, operand 0']
    #allocation3 [shape = 's32[2]{0}', space=sflag, size = 0x8, scoped, tag = 'scoped memory for tpu_custom_call.1']
    #allocation4 [shape = 's32[2]{0}', space=sflag, size = 0x8, scoped, tag = 'scoped memory for tpu_custom_call.1']
    #allocation5 [shape = 'u8[8192]{0}', space=vmem, size = 0x2000, scoped, tag = 'input window, operand 1, single buffered']
    #allocation6 [shape = 's32[1]{0}', space=sflag, size = 0x4, scoped, tag = 'scoped memory for tpu_custom_call.1']
    #allocation7 [shape = 'u8[8192]{0}', space=vmem, size = 0x2000, scoped, tag = 'input window, operand 2, single buffered']
    #allocation8 [shape = 'u8[8192]{0}', space=vmem, size = 0x2000, scoped, tag = 'input window, operand 3, single buffered']
    #allocation9 [shape = 's32[1]{0}', space=sflag, size = 0x4, scoped, tag = 'scoped memory for tpu_custom_call.1']
    #allocation10 [shape = 'u8[8192]{0}', space=vmem, size = 0x2000, scoped, tag = 'output window, operand 0']
    %14 = vsyncpa [#allocation3], 0
    %s15 = scalar_lea.sflag [#allocation3], 1
    %16 = vsyncpa %s15, 0
    %17 = vsyncpa [#allocation6], 0
    %18 = vsyncpa [#allocation9], 0
    %19 = vsyncpa [#allocation4], 0
    %s20 = scalar_lea.sflag [#allocation4], 1
    %21 = vsyncpa %s20, 0
    loop: start=0, step=1, limit=4
    $region2: #{tpu_custom_call.1} parent=1 // loop_pre_header
      _
    $region3: #{tpu_custom_call.1} parent=1 // loop_header
      %s23 = sphi 0, %s27
      %p24 = scmp.ge.s32.totalorder %s23, 4
      %s33 = sphi 0, %s35
      %s36 = sphi 0, %s33
      %s37 = sphi 0, %s36
      %s53 = sphi 0, %s37
      %s57 = sphi 0, %s57
      %s59 = sphi 0, %s57
      %s60 = sphi 0, %s59
      %s74 = sphi 0, %s60
      %s78 = sphi 0, %s78
      %s80 = sphi 0, %s78
      %s81 = sphi 0, %s80
      %s95 = sphi 0, %s81
      %s99 = sphi 0, %s99
      %s101 = sphi 0, %s99
      %s102 = sphi 0, %s101
      %s116 = sphi 0, %s102
      %s120 = sphi 0, %s120
      %s122 = sphi 0, %s120
      %s123 = sphi 0, %s122
      %s137 = sphi 0, %s123
      %s141 = sphi 0, %s141
      %s143 = sphi 0, %s141
      %s144 = sphi 0, %s143
      %s158 = sphi 0, %s144
      %s162 = sphi 0, %s162
      %s164 = sphi 0, %s162
      %s165 = sphi 0, %s164
      %s179 = sphi 0, %s165
      %s183 = sphi 0, %s183
      %s185 = sphi 0, %s183
      %s186 = sphi 0, %s185
      %s200 = sphi 0, %s186
      %s204 = sphi 0, %s204
      %s206 = sphi 0, %s204
      %s207 = sphi 0, %s206
      %s221 = sphi 0, %s207
      %s227 = sphi 0, %s229
      %s230 = sphi 0, %s227
      %s231 = sphi 0, %s230
      %s247 = sphi 0, %s231
    $region4: #{tpu_custom_call.1} parent=1 // loop_header_branch
      %26 = sbr.rel (%p24) target = $region8
    $region5: #{tpu_custom_call.1} parent=1 // loop_body
      %s28 = ssub.s32 %s23, 1
      %s29 = ssub.s32 %s23, 2
      %s30 = sadd.s32 %s23, 1
      %s31 = ssub.s32 %s23, %s30
      %p32 = scmp.eq.s32.totalorder %s31, 0
      %s34 = sadd.s32 %s33, 1
      %s35 = scalar_select %p32, %s33, %s34
      %p38 = pneg %p32
      %p39 = scmp.eq.s32.totalorder %s23, 1
      %p40 = por %p38, %p39
      %p41 = scmp.ne.s32.totalorder %s33, %s36
      %p42 = scmp.eq.s32.totalorder %s23, 0
      %p43 = por %p41, %p42
      %p44 = scmp.ne.s32.totalorder %s33, %s36
      %p45 = scmp.eq.s32.totalorder %s28, 1
      %p46 = por %p44, %p45
      %p47 = scmp.ne.s32.totalorder %s36, %s37
      %p48 = scmp.eq.s32.totalorder %s28, 0
      %p49 = por %p47, %p48
      %p50 = scmp.ne.s32.totalorder %s36, %s37
      %p51 = scmp.eq.s32.totalorder %s29, 1
      %p52 = por %p50, %p51
      %p54 = scmp.ne.s32.totalorder %s37, %s53
      %p55 = scmp.eq.s32.totalorder %s29, 0
      %p56 = por %p54, %p55
      %s58 = sadd.s32 %s57, 1
      %p61 = scmp.eq.s32.totalorder %s23, 1
      %p62 = scmp.ne.s32.totalorder %s57, %s59
      %p63 = scmp.eq.s32.totalorder %s23, 0
      %p64 = por %p62, %p63
      %p65 = scmp.ne.s32.totalorder %s57, %s59
      %p66 = scmp.eq.s32.totalorder %s28, 1
      %p67 = por %p65, %p66
      %p68 = scmp.ne.s32.totalorder %s59, %s60
      %p69 = scmp.eq.s32.totalorder %s28, 0
      %p70 = por %p68, %p69
      %p71 = scmp.ne.s32.totalorder %s59, %s60
      %p72 = scmp.eq.s32.totalorder %s29, 1
      %p73 = por %p71, %p72
      %p75 = scmp.ne.s32.totalorder %s60, %s74
      %p76 = scmp.eq.s32.totalorder %s29, 0
      %p77 = por %p75, %p76
      %s79 = sadd.s32 %s78, 1
      %p82 = scmp.eq.s32.totalorder %s23, 1
      %p83 = scmp.ne.s32.totalorder %s78, %s80
      %p84 = scmp.eq.s32.totalorder %s23, 0
      %p85 = por %p83, %p84
      %p86 = scmp.ne.s32.totalorder %s78, %s80
      %p87 = scmp.eq.s32.totalorder %s28, 1
      %p88 = por %p86, %p87
      %p89 = scmp.ne.s32.totalorder %s80, %s81
      %p90 = scmp.eq.s32.totalorder %s28, 0
      %p91 = por %p89, %p90
      %p92 = scmp.ne.s32.totalorder %s80, %s81
      %p93 = scmp.eq.s32.totalorder %s29, 1
      %p94 = por %p92, %p93
      %p96 = scmp.ne.s32.totalorder %s81, %s95
      %p97 = scmp.eq.s32.totalorder %s29, 0
      %p98 = por %p96, %p97
      %s100 = sadd.s32 %s99, 1
      %p103 = scmp.eq.s32.totalorder %s23, 1
      %p104 = scmp.ne.s32.totalorder %s99, %s101
      %p105 = scmp.eq.s32.totalorder %s23, 0
      %p106 = por %p104, %p105
      %p107 = scmp.ne.s32.totalorder %s99, %s101
      %p108 = scmp.eq.s32.totalorder %s28, 1
      %p109 = por %p107, %p108
      %p110 = scmp.ne.s32.totalorder %s101, %s102
      %p111 = scmp.eq.s32.totalorder %s28, 0
      %p112 = por %p110, %p111
      %p113 = scmp.ne.s32.totalorder %s101, %s102
      %p114 = scmp.eq.s32.totalorder %s29, 1
      %p115 = por %p113, %p114
      %p117 = scmp.ne.s32.totalorder %s102, %s116
      %p118 = scmp.eq.s32.totalorder %s29, 0
      %p119 = por %p117, %p118
      %s121 = sadd.s32 %s120, 1
      %p124 = scmp.eq.s32.totalorder %s23, 1
      %p125 = scmp.ne.s32.totalorder %s120, %s122
      %p126 = scmp.eq.s32.totalorder %s23, 0
      %p127 = por %p125, %p126
      %p128 = scmp.ne.s32.totalorder %s120, %s122
      %p129 = scmp.eq.s32.totalorder %s28, 1
      %p130 = por %p128, %p129
      %p131 = scmp.ne.s32.totalorder %s122, %s123
      %p132 = scmp.eq.s32.totalorder %s28, 0
      %p133 = por %p131, %p132
      %p134 = scmp.ne.s32.totalorder %s122, %s123
      %p135 = scmp.eq.s32.totalorder %s29, 1
      %p136 = por %p134, %p135
      %p138 = scmp.ne.s32.totalorder %s123, %s137
      %p139 = scmp.eq.s32.totalorder %s29, 0
      %p140 = por %p138, %p139
      %s142 = sadd.s32 %s141, 1
      %p145 = scmp.eq.s32.totalorder %s23, 1
      %p146 = scmp.ne.s32.totalorder %s141, %s143
      %p147 = scmp.eq.s32.totalorder %s23, 0
      %p148 = por %p146, %p147
      %p149 = scmp.ne.s32.totalorder %s141, %s143
      %p150 = scmp.eq.s32.totalorder %s28, 1
      %p151 = por %p149, %p150
      %p152 = scmp.ne.s32.totalorder %s143, %s144
      %p153 = scmp.eq.s32.totalorder %s28, 0
      %p154 = por %p152, %p153
      %p155 = scmp.ne.s32.totalorder %s143, %s144
      %p156 = scmp.eq.s32.totalorder %s29, 1
      %p157 = por %p155, %p156
      %p159 = scmp.ne.s32.totalorder %s144, %s158
      %p160 = scmp.eq.s32.totalorder %s29, 0
      %p161 = por %p159, %p160
      %s163 = sadd.s32 %s162, 1
      %p166 = scmp.eq.s32.totalorder %s23, 1
      %p167 = scmp.ne.s32.totalorder %s162, %s164
      %p168 = scmp.eq.s32.totalorder %s23, 0
      %p169 = por %p167, %p168
      %p170 = scmp.ne.s32.totalorder %s162, %s164
      %p171 = scmp.eq.s32.totalorder %s28, 1
      %p172 = por %p170, %p171
      %p173 = scmp.ne.s32.totalorder %s164, %s165
      %p174 = scmp.eq.s32.totalorder %s28, 0
      %p175 = por %p173, %p174
      %p176 = scmp.ne.s32.totalorder %s164, %s165
      %p177 = scmp.eq.s32.totalorder %s29, 1
      %p178 = por %p176, %p177
      %p180 = scmp.ne.s32.totalorder %s165, %s179
      %p181 = scmp.eq.s32.totalorder %s29, 0
      %p182 = por %p180, %p181
      %s184 = sadd.s32 %s183, 1
      %p187 = scmp.eq.s32.totalorder %s23, 1
      %p188 = scmp.ne.s32.totalorder %s183, %s185
      %p189 = scmp.eq.s32.totalorder %s23, 0
      %p190 = por %p188, %p189
      %p191 = scmp.ne.s32.totalorder %s183, %s185
      %p192 = scmp.eq.s32.totalorder %s28, 1
      %p193 = por %p191, %p192
      %p194 = scmp.ne.s32.totalorder %s185, %s186
      %p195 = scmp.eq.s32.totalorder %s28, 0
      %p196 = por %p194, %p195
      %p197 = scmp.ne.s32.totalorder %s185, %s186
      %p198 = scmp.eq.s32.totalorder %s29, 1
      %p199 = por %p197, %p198
      %p201 = scmp.ne.s32.totalorder %s186, %s200
      %p202 = scmp.eq.s32.totalorder %s29, 0
      %p203 = por %p201, %p202
      %s205 = sadd.s32 %s204, 1
      %p208 = scmp.eq.s32.totalorder %s23, 1
      %p209 = scmp.ne.s32.totalorder %s204, %s206
      %p210 = scmp.eq.s32.totalorder %s23, 0
      %p211 = por %p209, %p210
      %p212 = scmp.ne.s32.totalorder %s204, %s206
      %p213 = scmp.eq.s32.totalorder %s28, 1
      %p214 = por %p212, %p213
      %p215 = scmp.ne.s32.totalorder %s206, %s207
      %p216 = scmp.eq.s32.totalorder %s28, 0
      %p217 = por %p215, %p216
      %p218 = scmp.ne.s32.totalorder %s206, %s207
      %p219 = scmp.eq.s32.totalorder %s29, 1
      %p220 = por %p218, %p219
      %p222 = scmp.ne.s32.totalorder %s207, %s221
      %p223 = scmp.eq.s32.totalorder %s29, 0
      %p224 = por %p222, %p223
      %s225 = ssub.s32 %s23, %s30
      %p226 = scmp.eq.s32.totalorder %s225, 0
      %s228 = sadd.s32 %s227, 1
      %s229 = scalar_select %p226, %s227, %s228
      %p232 = pneg %p226
      %p233 = scmp.eq.s32.totalorder %s23, 1
      %p234 = por %p232, %p233
      %p235 = scmp.ne.s32.totalorder %s227, %s230
      %p236 = scmp.eq.s32.totalorder %s23, 0
      %p237 = por %p235, %p236
      %p238 = scmp.ne.s32.totalorder %s227, %s230
      %p239 = scmp.eq.s32.totalorder %s28, 1
      %p240 = por %p238, %p239
      %p241 = scmp.ne.s32.totalorder %s230, %s231
      %p242 = scmp.eq.s32.totalorder %s28, 0
      %p243 = por %p241, %p242
      %p244 = scmp.ne.s32.totalorder %s230, %s231
      %p245 = scmp.eq.s32.totalorder %s29, 1
      %p246 = por %p244, %p245
      %p248 = scmp.ne.s32.totalorder %s231, %s247
      %p249 = scmp.eq.s32.totalorder %s29, 0
      %p250 = por %p248, %p249
      %p251 = scmp.le.s32.totalorder 1, %s23
      %p252 = scmp.lt.s32.totalorder %s23, 3
      %p253 = pnand %p251, %p252
      %p254 = pneg %p253
      // Predicated region
      $region9: #{tpu_custom_call.1} parent=5 // pred_check
        _
      $region10: #{tpu_custom_call.1} parent=5 // pred_check_branch
        %256 = sbr.rel (%p253) target = $region12
      $region11: #{tpu_custom_call.1} parent=5 // pred_region
        %s257 = ssub.s32 %s23, 1
        // Predicated region
        $region13: #{tpu_custom_call.1} parent=11 // pred_check
          %p258 = pneg %p70
        $region14: #{tpu_custom_call.1} parent=11 // pred_check_branch
          %260 = sbr.rel (%p258) target = $region16
        $region15: #{tpu_custom_call.1} parent=11 // pred_region
          %s262 = ssub.s32 256, 256
          %263 = vsyncadd [#allocation6], %s262
          %s264 = sshll.u32 [#allocation5], 4
          %s265 = int_to_ptr.vmem [resolvable:$true] %s264
          %270 = dma.hbm_to_vmem [thread:$0]  %s1, 256, %s265, [#allocation6], 64, 64, 4
        $region16: #{tpu_custom_call.1} parent=11 // pred_fallthru
          _
        // Predicated region
        $region17: #{tpu_custom_call.1} parent=11 // pred_check
          %p271 = pneg %p91
        $region18: #{tpu_custom_call.1} parent=11 // pred_check_branch
          %273 = sbr.rel (%p271) target = $region20
        $region19: #{tpu_custom_call.1} parent=11 // pred_region
          %s275 = ssub.s32 256, 256
          %276 = vsyncadd [#allocation6], %s275
          %s277 = sshll.u32 [#allocation7], 4
          %s278 = int_to_ptr.vmem [resolvable:$true] %s277
          %283 = dma.hbm_to_vmem [thread:$0]  %s2, 256, %s278, [#allocation6], 64, 64, 4
        $region20: #{tpu_custom_call.1} parent=11 // pred_fallthru
          _
        // Predicated region
        $region21: #{tpu_custom_call.1} parent=11 // pred_check
          %p284 = pneg %p112
        $region22: #{tpu_custom_call.1} parent=11 // pred_check_branch
          %286 = sbr.rel (%p284) target = $region24
        $region23: #{tpu_custom_call.1} parent=11 // pred_region
          %s288 = ssub.s32 256, 256
          %289 = vsyncadd [#allocation9], %s288
          %s290 = sshll.u32 [#allocation8], 4
          %s291 = int_to_ptr.vmem [resolvable:$true] %s290
          %296 = dma.hbm_to_vmem [thread:$0]  %s3, 256, %s291, [#allocation9], 64, 64, 4
        $region24: #{tpu_custom_call.1} parent=11 // pred_fallthru
          _
        // Predicated region
        $region25: #{tpu_custom_call.1} parent=11 // pred_check
          %p297 = pneg %p133
        $region26: #{tpu_custom_call.1} parent=11 // pred_check_branch
          %299 = sbr.rel (%p297) target = $region28
        $region27: #{tpu_custom_call.1} parent=11 // pred_region
          _
        $region28: #{tpu_custom_call.1} parent=11 // pred_fallthru
          _
        // Predicated region
        $region29: #{tpu_custom_call.1} parent=11 // pred_check
          %p300 = pneg %p154
        $region30: #{tpu_custom_call.1} parent=11 // pred_check_branch
          %302 = sbr.rel (%p300) target = $region32
        $region31: #{tpu_custom_call.1} parent=11 // pred_region
          _
        $region32: #{tpu_custom_call.1} parent=11 // pred_fallthru
          _
        // Predicated region
        $region33: #{tpu_custom_call.1} parent=11 // pred_check
          %p303 = pneg %p175
        $region34: #{tpu_custom_call.1} parent=11 // pred_check_branch
          %305 = sbr.rel (%p303) target = $region36
        $region35: #{tpu_custom_call.1} parent=11 // pred_region
          _
        $region36: #{tpu_custom_call.1} parent=11 // pred_fallthru
          _
        // Predicated region
        $region37: #{tpu_custom_call.1} parent=11 // pred_check
          %p306 = pneg %p196
        $region38: #{tpu_custom_call.1} parent=11 // pred_check_branch
          %308 = sbr.rel (%p306) target = $region40
        $region39: #{tpu_custom_call.1} parent=11 // pred_region
          _
        $region40: #{tpu_custom_call.1} parent=11 // pred_fallthru
          _
        // Predicated region
        $region41: #{tpu_custom_call.1} parent=11 // pred_check
          %p309 = pneg %p217
        $region42: #{tpu_custom_call.1} parent=11 // pred_check_branch
          %311 = sbr.rel (%p309) target = $region44
        $region43: #{tpu_custom_call.1} parent=11 // pred_region
          _
        $region44: #{tpu_custom_call.1} parent=11 // pred_fallthru
          _
      $region12: #{tpu_custom_call.1} parent=5 // pred_fallthru
        _
      %p312 = scmp.lt.s32.totalorder %s23, 2
      // Predicated region
      $region45: #{tpu_custom_call.1} parent=5 // pred_check
        %p313 = pneg %p312
      $region46: #{tpu_custom_call.1} parent=5 // pred_check_branch
        %315 = sbr.rel (%p313) target = $region48
      $region47: #{tpu_custom_call.1} parent=5 // pred_region
        // Predicated region
        $region49: #{tpu_custom_call.1} parent=47 // pred_check
          %p316 = pneg %p43
        $region50: #{tpu_custom_call.1} parent=47 // pred_check_branch
          %318 = sbr.rel (%p316) target = $region52
        $region51: #{tpu_custom_call.1} parent=47 // pred_region
          %s319 = sand.u32 %s33, 1
          %s320 = scalar_lea.sflag [#allocation3], %s319
          %s321 = sand.u32 %s33, 1
          %s322 = smul.addr %s321, 8
          %s323 = scalar_lea.vmem [#allocation2], %s322
          %s325 = ssub.s32 128, 128
          %326 = vsyncadd %s320, %s325
          %s327 = smul.addr %s23, 128
          %s328 = scalar_lea.hbm %s0, %s327
          %s330 = sshll.u32 %s323, 4
          %s331 = int_to_ptr.vmem [resolvable:$true] %s330
          %333 = dma.hbm_to_vmem [thread:$0]  %s328, 128, %s331, %s320
        $region52: #{tpu_custom_call.1} parent=47 // pred_fallthru
          _
      $region48: #{tpu_custom_call.1} parent=5 // pred_fallthru
        _
      %p334 = scmp.le.s32.totalorder 1, %s23
      %p335 = scmp.lt.s32.totalorder %s23, 3
      %p336 = pnand %p334, %p335
      %p337 = pneg %p336
      // Predicated region
      $region53: #{tpu_custom_call.1} parent=5 // pred_check
        _
      $region54: #{tpu_custom_call.1} parent=5 // pred_check_branch
        %339 = sbr.rel (%p336) target = $region56
      $region55: #{tpu_custom_call.1} parent=5 // pred_region
        %s340 = ssub.s32 %s23, 1
        %s341 = sand.u32 %s36, 1
        %s342 = scalar_lea.sflag [#allocation3], %s341
        %s343 = sand.u32 %s36, 1
        %s344 = smul.addr %s343, 8
        %s345 = scalar_lea.vmem [#allocation2], %s344
        // Predicated region
        $region57: #{tpu_custom_call.1} parent=55 // pred_check
          %p346 = pneg %p49
        $region58: #{tpu_custom_call.1} parent=55 // pred_check_branch
          %348 = sbr.rel (%p346) target = $region60
        $region59: #{tpu_custom_call.1} parent=55 // pred_region
          %349 = dma.done %s342, 128
        $region60: #{tpu_custom_call.1} parent=55 // pred_fallthru
          _
        // Predicated region
        $region61: #{tpu_custom_call.1} parent=55 // pred_check
          %p350 = pneg %p70
        $region62: #{tpu_custom_call.1} parent=55 // pred_check_branch
          %352 = sbr.rel (%p350) target = $region64
        $region63: #{tpu_custom_call.1} parent=55 // pred_region
          %353 = dma.done [#allocation6], 256
        $region64: #{tpu_custom_call.1} parent=55 // pred_fallthru
          _
        // Predicated region
        $region65: #{tpu_custom_call.1} parent=55 // pred_check
          %p354 = pneg %p91
        $region66: #{tpu_custom_call.1} parent=55 // pred_check_branch
          %356 = sbr.rel (%p354) target = $region68
        $region67: #{tpu_custom_call.1} parent=55 // pred_region
          %357 = dma.done [#allocation6], 256
        $region68: #{tpu_custom_call.1} parent=55 // pred_fallthru
          _
        // Predicated region
        $region69: #{tpu_custom_call.1} parent=55 // pred_check
          %p358 = pneg %p112
        $region70: #{tpu_custom_call.1} parent=55 // pred_check_branch
          %360 = sbr.rel (%p358) target = $region72
        $region71: #{tpu_custom_call.1} parent=55 // pred_region
          %361 = dma.done [#allocation9], 256
        $region72: #{tpu_custom_call.1} parent=55 // pred_fallthru
          _
        %s362 = sand.u32 %s36, 1
        %s363 = scalar_lea.sflag [#allocation3], %s362
        %s364 = sand.u32 %s36, 1
        %s365 = smul.addr %s364, 8
        %s366 = scalar_lea.vmem [#allocation2], %s365
        %p367 = pneg %p49
        %p368 = pneg %p46
        %p369 = pneg %p70
        %p370 = pneg %p67
        %p371 = pneg %p91
        %p372 = pneg %p88
        %p373 = pneg %p112
        %p374 = pneg %p109
        %p375 = pneg %p133
        %p376 = pneg %p130
        %p377 = pneg %p154
        %p378 = pneg %p151
        %p379 = pneg %p175
        %p380 = pneg %p172
        %p381 = pneg %p196
        %p382 = pneg %p193
        %p383 = pneg %p217
        %p384 = pneg %p214
        %p385 = pneg %p243
        %p386 = pneg %p240
        %s387 = sand.u32 %s230, 1
        %s388 = scalar_lea.sflag [#allocation4], %s387
        %s389 = sand.u32 %s230, 1
        %s390 = smul.addr %s389, 8
        %s391 = scalar_lea.vmem [#allocation10], %s390
        %v393 = vld [vmem:[%s345] sm:$0xff]
        %v394 = vpack.c.bf16 %v393, %v393
        %v395 = vld [vmem:[#allocation5] sm:$0xf]
        %v396 = vld [vmem:[#allocation5 + $0x4] sm:$0xf]
        %v397 = vld [vmem:[#allocation5 + $0x8] sm:$0xf]
        %v398 = vld [vmem:[#allocation5 + $0xc] sm:$0xf]
        %v399 = vld [vmem:[%s4] sm:$0x1]
        %v401 = vlaneseq
        %v402 = vshrl.u32 %v401, 7
        %v403 = vsub.s32 0, %v402
        %v404 = vrot.slane %v399, %v403
        %v410 = vunpack.c.l.b16 %v395
        %v411 = vunpack.c.l.b16 %v396
        %v412 = vunpack.c.l.b16 %v397
        %v413 = vunpack.c.l.b16 %v398
        %v414 = vpack.c.b16 %v411, %v410
        %v415 = vpack.c.b16 %v413, %v412
        %vm418 = vcmask 261120
        %v420 = vsel %vm418, %v394, 0
        %422 = vmatprep.subr.bf16.mxu0 0
        %423 = vmatpush1.bf16.msra.mxu0 %v414
        %424 = vmatprep.subr.bf16.mxu0 0
        %425 = vmatpush1.bf16.msra.mxu0 %v415
        %426 = vmatprep.subr.bf16.mxu0 0
        %427 = vmatpush1.bf16.msra.mxu0 0
        %428 = vmatprep.subr.bf16.mxu0 0
        %429 = vmatpush1.bf16.msra.mxu0 0
        %430 = vmatprep.subr.bf16.mxu0 0
        %431 = vmatpush1.bf16.msra.mxu0 0
        %432 = vmatprep.subr.bf16.mxu0 0
        %433 = vmatpush1.bf16.msra.mxu0 0
        %434 = vmatprep.subr.bf16.mxu0 0
        %435 = vmatpush1.bf16.msra.mxu0 0
        %436 = vmatprep.subr.bf16.mxu0 0
        %437 = vmatpush1.bf16.msra.mxu0 0
        %438 = vmatprep.subr.bf16.mxu0 0
        %439 = vmatpush1.bf16.msra.mxu0 0
        %440 = vmatprep.subr.bf16.mxu0 0
        %441 = vmatpush1.bf16.msra.mxu0 0
        %442 = vmatprep.subr.bf16.mxu0 0
        %443 = vmatpush1.bf16.msra.mxu0 0
        %444 = vmatprep.subr.bf16.mxu0 0
        %445 = vmatpush1.bf16.msra.mxu0 0
        %446 = vmatprep.subr.bf16.mxu0 0
        %447 = vmatpush1.bf16.msra.mxu0 0
        %448 = vmatprep.subr.bf16.mxu0 0
        %449 = vmatpush1.bf16.msra.mxu0 0
        %450 = vmatprep.subr.bf16.mxu0 0
        %451 = vmatpush1.bf16.msra.mxu0 0
        %452 = vmatprep.subr.bf16.mxu0 0
        %453 = vmatpush1.bf16.msra.mxu0 0
        %454 = vmatprep.mubr.bf16.mxu0 0
        %455 = vmatmul.mubr.bf16.gmra.mrb[0].mxu0 %v420
        %v456 = vpop.f32.mrb[0].mxu0
        %v457 = vadd.f32 %v404, %v456
        %v458 = vpop.f32.mrb[0].mxu0
        %v459 = vpop.f32.mrb[0].mxu0
        %v460 = vpop.f32.mrb[0].mxu0
        %461 = vdwg.mxu0
        %v462 = vpack.c.bf16 %v457, %v457
        %v463 = vld [vmem:[#allocation7] sm:$0xf]
        %v464 = vld [vmem:[#allocation7 + $0x4] sm:$0xf]
        %v465 = vld [vmem:[#allocation7 + $0x8] sm:$0xf]
        %v466 = vld [vmem:[#allocation7 + $0xc] sm:$0xf]
        %v467 = vld [vmem:[%s5] sm:$0x1]
        %v469 = vlaneseq
        %v470 = vshrl.u32 %v469, 7
        %v471 = vsub.s32 0, %v470
        %v472 = vrot.slane %v467, %v471
        %v478 = vunpack.c.l.b16 %v463
        %v479 = vunpack.c.l.b16 %v464
        %v480 = vunpack.c.l.b16 %v465
        %v481 = vunpack.c.l.b16 %v466
        %v482 = vpack.c.b16 %v479, %v478
        %v483 = vpack.c.b16 %v481, %v480
        %486 = vmatprep.subr.bf16.mxu0 0
        %487 = vmatpush1.bf16.msra.mxu0 %v482
        %488 = vmatprep.subr.bf16.mxu0 0
        %489 = vmatpush1.bf16.msra.mxu0 %v483
        %490 = vmatprep.subr.bf16.mxu0 0
        %491 = vmatpush1.bf16.msra.mxu0 0
        %492 = vmatprep.subr.bf16.mxu0 0
        %493 = vmatpush1.bf16.msra.mxu0 0
        %494 = vmatprep.subr.bf16.mxu0 0
        %495 = vmatpush1.bf16.msra.mxu0 0
        %496 = vmatprep.subr.bf16.mxu0 0
        %497 = vmatpush1.bf16.msra.mxu0 0
        %498 = vmatprep.subr.bf16.mxu0 0
        %499 = vmatpush1.bf16.msra.mxu0 0
        %500 = vmatprep.subr.bf16.mxu0 0
        %501 = vmatpush1.bf16.msra.mxu0 0
        %502 = vmatprep.subr.bf16.mxu0 0
        %503 = vmatpush1.bf16.msra.mxu0 0
        %504 = vmatprep.subr.bf16.mxu0 0
        %505 = vmatpush1.bf16.msra.mxu0 0
        %506 = vmatprep.subr.bf16.mxu0 0
        %507 = vmatpush1.bf16.msra.mxu0 0
        %508 = vmatprep.subr.bf16.mxu0 0
        %509 = vmatpush1.bf16.msra.mxu0 0
        %510 = vmatprep.subr.bf16.mxu0 0
        %511 = vmatpush1.bf16.msra.mxu0 0
        %512 = vmatprep.subr.bf16.mxu0 0
        %513 = vmatpush1.bf16.msra.mxu0 0
        %514 = vmatprep.subr.bf16.mxu0 0
        %515 = vmatpush1.bf16.msra.mxu0 0
        %516 = vmatprep.subr.bf16.mxu0 0
        %517 = vmatpush1.bf16.msra.mxu0 0
        %518 = vmatprep.mubr.bf16.mxu0 0
        %519 = vmatmul.mubr.bf16.gmra.mrb[0].mxu0 %v420
        %v520 = vpop.f32.mrb[0].mxu0
        %v521 = vadd.f32 %v472, %v520
        %v522 = vpop.f32.mrb[0].mxu0
        %v523 = vpop.f32.mrb[0].mxu0
        %v524 = vpop.f32.mrb[0].mxu0
        %525 = vdwg.mxu0
        %v526 = vpack.c.bf16 %v521, %v521
        %v527 = vld [vmem:[#allocation8] sm:$0xf]
        %v528 = vld [vmem:[#allocation8 + $0x4] sm:$0xf]
        %v529 = vld [vmem:[#allocation8 + $0x8] sm:$0xf]
        %v530 = vld [vmem:[#allocation8 + $0xc] sm:$0xf]
        %v531 = vld [vmem:[%s6] sm:$0x1]
        %v533 = vlaneseq
        %v534 = vshrl.u32 %v533, 7
        %v535 = vsub.s32 0, %v534
        %v536 = vrot.slane %v531, %v535
        %v542 = vunpack.c.l.b16 %v527
        %v543 = vunpack.c.l.b16 %v528
        %v544 = vunpack.c.l.b16 %v529
        %v545 = vunpack.c.l.b16 %v530
        %v546 = vpack.c.b16 %v543, %v542
        %v547 = vpack.c.b16 %v545, %v544
        %550 = vmatprep.subr.bf16.mxu0 0
        %551 = vmatpush1.bf16.msra.mxu0 %v546
        %552 = vmatprep.subr.bf16.mxu0 0
        %553 = vmatpush1.bf16.msra.mxu0 %v547
        %554 = vmatprep.subr.bf16.mxu0 0
        %555 = vmatpush1.bf16.msra.mxu0 0
        %556 = vmatprep.subr.bf16.mxu0 0
        %557 = vmatpush1.bf16.msra.mxu0 0
        %558 = vmatprep.subr.bf16.mxu0 0
        %559 = vmatpush1.bf16.msra.mxu0 0
        %560 = vmatprep.subr.bf16.mxu0 0
        %561 = vmatpush1.bf16.msra.mxu0 0
        %562 = vmatprep.subr.bf16.mxu0 0
        %563 = vmatpush1.bf16.msra.mxu0 0
        %564 = vmatprep.subr.bf16.mxu0 0
        %565 = vmatpush1.bf16.msra.mxu0 0
        %566 = vmatprep.subr.bf16.mxu0 0
        %567 = vmatpush1.bf16.msra.mxu0 0
        %568 = vmatprep.subr.bf16.mxu0 0
        %569 = vmatpush1.bf16.msra.mxu0 0
        %570 = vmatprep.subr.bf16.mxu0 0
        %571 = vmatpush1.bf16.msra.mxu0 0
        %572 = vmatprep.subr.bf16.mxu0 0
        %573 = vmatpush1.bf16.msra.mxu0 0
        %574 = vmatprep.subr.bf16.mxu0 0
        %575 = vmatpush1.bf16.msra.mxu0 0
        %576 = vmatprep.subr.bf16.mxu0 0
        %577 = vmatpush1.bf16.msra.mxu0 0
        %578 = vmatprep.subr.bf16.mxu0 0
        %579 = vmatpush1.bf16.msra.mxu0 0
        %580 = vmatprep.subr.bf16.mxu0 0
        %581 = vmatpush1.bf16.msra.mxu0 0
        %582 = vmatprep.mubr.bf16.mxu0 0
        %583 = vmatmul.mubr.bf16.gmra.mrb[0].mxu0 %v420
        %v584 = vpop.f32.mrb[0].mxu0
        %v585 = vadd.f32 %v536, %v584
        %v586 = vpop.f32.mrb[0].mxu0
        %v587 = vpop.f32.mrb[0].mxu0
        %v588 = vpop.f32.mrb[0].mxu0
        %589 = vdwg.mxu0
        %v590 = vpack.c.bf16 %v585, %v585
        %vm591 = vcmask 64512
        %v593 = vsel %vm591, %v462, 0
        %v596 = vsel %vm591, %v526, 0
        %598 = vmatprep.subr.bf16.mxu0 0
        %599 = vmatpush1.bf16.xpose.msra.mxu0 %v596
        %600 = vmatprep.subr.bf16.mxu0 0
        %601 = vmatpush1.bf16.xpose.msra.mxu0 0
        %602 = vmatprep.subr.bf16.mxu0 0
        %603 = vmatpush1.bf16.xpose.msra.mxu0 0
        %604 = vmatprep.subr.bf16.mxu0 0
        %605 = vmatpush1.bf16.xpose.msra.mxu0 0
        %606 = vmatprep.subr.bf16.mxu0 0
        %607 = vmatpush1.bf16.xpose.msra.mxu0 0
        %608 = vmatprep.subr.bf16.mxu0 0
        %609 = vmatpush1.bf16.xpose.msra.mxu0 0
        %610 = vmatprep.subr.bf16.mxu0 0
        %611 = vmatpush1.bf16.xpose.msra.mxu0 0
        %612 = vmatprep.subr.bf16.mxu0 0
        %613 = vmatpush1.bf16.xpose.msra.mxu0 0
        %614 = vmatprep.subr.bf16.mxu0 0
        %615 = vmatpush1.bf16.xpose.msra.mxu0 0
        %616 = vmatprep.subr.bf16.mxu0 0
        %617 = vmatpush1.bf16.xpose.msra.mxu0 0
        %618 = vmatprep.subr.bf16.mxu0 0
        %619 = vmatpush1.bf16.xpose.msra.mxu0 0
        %620 = vmatprep.subr.bf16.mxu0 0
        %621 = vmatpush1.bf16.xpose.msra.mxu0 0
        %622 = vmatprep.subr.bf16.mxu0 0
        %623 = vmatpush1.bf16.xpose.msra.mxu0 0
        %624 = vmatprep.subr.bf16.mxu0 0
        %625 = vmatpush1.bf16.xpose.msra.mxu0 0
        %626 = vmatprep.subr.bf16.mxu0 0
        %627 = vmatpush1.bf16.xpose.msra.mxu0 0
        %628 = vmatprep.subr.bf16.mxu0 0
        %629 = vmatpush1.bf16.xpose.msra.mxu0 0
        %630 = vmatprep.mubr.bf16.mxu0 0
        %631 = vmatmul.mubr.bf16.gmra.mrb[0].mxu0 %v593
        %v632 = vpop.f32.mrb[0].mxu0
        %v633 = vadd.f32 0.0, %v632
        %v634 = vpop.f32.mrb[0].mxu0
        %v635 = vpop.f32.mrb[0].mxu0
        %v636 = vpop.f32.mrb[0].mxu0
        %637 = vdwg.mxu0
        %v638 = vsel %vm591, %v633, -inf
        %639 = vmax.xlane.f32.xlu0 %v638
        %v640 = vpop.xlane.xlu0 %639
        %v641 = vsub.f32 %v633, %v640
        %v642 = vmul.f32 %v641, 1.442695
        %v643 = vpow.pop %v642
        %v644 = vsel %vm591, %v643, 0.0
        %645 = vadd.xlane.f32.xlu0 %v644
        %v646 = vpop.xlane.xlu0 %645
        %v647 = vrcp.pop %v646
        %v648 = vmul.f32 %v643, %v647
        %v649 = vpack.c.bf16 %v648, %v648
        %v651 = vsel %vm591, %v649, 0
        %vm653 = vcmask 1043456
        %v655 = vsel %vm653, %v590, 0
        %657 = vmatprep.subr.bf16.mxu0 0
        %658 = vmatpush1.bf16.msra.mxu0 %v655
        %659 = vmatprep.subr.bf16.mxu0 0
        %660 = vmatpush1.bf16.msra.mxu0 0
        %661 = vmatprep.subr.bf16.mxu0 0
        %662 = vmatpush1.bf16.msra.mxu0 0
        %663 = vmatprep.subr.bf16.mxu0 0
        %664 = vmatpush1.bf16.msra.mxu0 0
        %665 = vmatprep.subr.bf16.mxu0 0
        %666 = vmatpush1.bf16.msra.mxu0 0
        %667 = vmatprep.subr.bf16.mxu0 0
        %668 = vmatpush1.bf16.msra.mxu0 0
        %669 = vmatprep.subr.bf16.mxu0 0
        %670 = vmatpush1.bf16.msra.mxu0 0
        %671 = vmatprep.subr.bf16.mxu0 0
        %672 = vmatpush1.bf16.msra.mxu0 0
        %673 = vmatprep.subr.bf16.mxu0 0
        %674 = vmatpush1.bf16.msra.mxu0 0
        %675 = vmatprep.subr.bf16.mxu0 0
        %676 = vmatpush1.bf16.msra.mxu0 0
        %677 = vmatprep.subr.bf16.mxu0 0
        %678 = vmatpush1.bf16.msra.mxu0 0
        %679 = vmatprep.subr.bf16.mxu0 0
        %680 = vmatpush1.bf16.msra.mxu0 0
        %681 = vmatprep.subr.bf16.mxu0 0
        %682 = vmatpush1.bf16.msra.mxu0 0
        %683 = vmatprep.subr.bf16.mxu0 0
        %684 = vmatpush1.bf16.msra.mxu0 0
        %685 = vmatprep.subr.bf16.mxu0 0
        %686 = vmatpush1.bf16.msra.mxu0 0
        %687 = vmatprep.subr.bf16.mxu0 0
        %688 = vmatpush1.bf16.msra.mxu0 0
        %689 = vmatprep.mubr.bf16.mxu0 0
        %690 = vmatmul.mubr.bf16.gmra.mrb[0].mxu0 %v651
        %v691 = vpop.f32.mrb[0].mxu0
        %v692 = vadd.f32 0.0, %v691
        %v693 = vpop.f32.mrb[0].mxu0
        %v694 = vpop.f32.mrb[0].mxu0
        %v695 = vpop.f32.mrb[0].mxu0
        %696 = vdwg.mxu0
        %v697 = vpack.c.bf16 %v692, %v692
        %v698 = vld [vmem:[%s7] sm:$0xf]
        %700 = vrot.lane.b32.xlu0 %v462, 120
        %v701 = vpop.permute.xlu0 %700
        %703 = vrot.lane.b32.xlu0 %v526, 120
        %v704 = vpop.permute.xlu0 %703
        %v706 = vsel %vm591, %v701, 0
        %v709 = vsel %vm591, %v704, 0
        %711 = vmatprep.subr.bf16.mxu0 0
        %712 = vmatpush1.bf16.xpose.msra.mxu0 %v709
        %713 = vmatprep.subr.bf16.mxu0 0
        %714 = vmatpush1.bf16.xpose.msra.mxu0 0
        %715 = vmatprep.subr.bf16.mxu0 0
        %716 = vmatpush1.bf16.xpose.msra.mxu0 0
        %717 = vmatprep.subr.bf16.mxu0 0
        %718 = vmatpush1.bf16.xpose.msra.mxu0 0
        %719 = vmatprep.subr.bf16.mxu0 0
        %720 = vmatpush1.bf16.xpose.msra.mxu0 0
        %721 = vmatprep.subr.bf16.mxu0 0
        %722 = vmatpush1.bf16.xpose.msra.mxu0 0
        %723 = vmatprep.subr.bf16.mxu0 0
        %724 = vmatpush1.bf16.xpose.msra.mxu0 0
        %725 = vmatprep.subr.bf16.mxu0 0
        %726 = vmatpush1.bf16.xpose.msra.mxu0 0
        %727 = vmatprep.subr.bf16.mxu0 0
        %728 = vmatpush1.bf16.xpose.msra.mxu0 0
        %729 = vmatprep.subr.bf16.mxu0 0
        %730 = vmatpush1.bf16.xpose.msra.mxu0 0
        %731 = vmatprep.subr.bf16.mxu0 0
        %732 = vmatpush1.bf16.xpose.msra.mxu0 0
        %733 = vmatprep.subr.bf16.mxu0 0
        %734 = vmatpush1.bf16.xpose.msra.mxu0 0
        %735 = vmatprep.subr.bf16.mxu0 0
        %736 = vmatpush1.bf16.xpose.msra.mxu0 0
        %737 = vmatprep.subr.bf16.mxu0 0
        %738 = vmatpush1.bf16.xpose.msra.mxu0 0
        %739 = vmatprep.subr.bf16.mxu0 0
        %740 = vmatpush1.bf16.xpose.msra.mxu0 0
        %741 = vmatprep.subr.bf16.mxu0 0
        %742 = vmatpush1.bf16.xpose.msra.mxu0 0
        %743 = vmatprep.mubr.bf16.mxu0 0
        %744 = vmatmul.mubr.bf16.gmra.mrb[0].mxu0 %v706
        %v745 = vpop.f32.mrb[0].mxu0
        %v746 = vadd.f32 0.0, %v745
        %v747 = vpop.f32.mrb[0].mxu0
        %v748 = vpop.f32.mrb[0].mxu0
        %v749 = vpop.f32.mrb[0].mxu0
        %750 = vdwg.mxu0
        %v751 = vsel %vm591, %v746, -inf
        %752 = vmax.xlane.f32.xlu0 %v751
        %v753 = vpop.xlane.xlu0 %752
        %v754 = vsub.f32 %v746, %v753
        %v755 = vmul.f32 %v754, 1.442695
        %v756 = vpow.pop %v755
        %v757 = vsel %vm591, %v756, 0.0
        %758 = vadd.xlane.f32.xlu0 %v757
        %v759 = vpop.xlane.xlu0 %758
        %v760 = vrcp.pop %v759
        %v761 = vmul.f32 %v756, %v760
        %v762 = vpack.c.bf16 %v761, %v761
        %764 = vrot.lane.b32.xlu0 %v590, 120
        %v765 = vpop.permute.xlu0 %764
        %v767 = vsel %vm591, %v762, 0
        %v770 = vsel %vm653, %v765, 0
        %772 = vmatprep.subr.bf16.mxu0 0
        %773 = vmatpush1.bf16.msra.mxu0 %v770
        %774 = vmatprep.subr.bf16.mxu0 0
        %775 = vmatpush1.bf16.msra.mxu0 0
        %776 = vmatprep.subr.bf16.mxu0 0
        %777 = vmatpush1.bf16.msra.mxu0 0
        %778 = vmatprep.subr.bf16.mxu0 0
        %779 = vmatpush1.bf16.msra.mxu0 0
        %780 = vmatprep.subr.bf16.mxu0 0
        %781 = vmatpush1.bf16.msra.mxu0 0
        %782 = vmatprep.subr.bf16.mxu0 0
        %783 = vmatpush1.bf16.msra.mxu0 0
        %784 = vmatprep.subr.bf16.mxu0 0
        %785 = vmatpush1.bf16.msra.mxu0 0
        %786 = vmatprep.subr.bf16.mxu0 0
        %787 = vmatpush1.bf16.msra.mxu0 0
        %788 = vmatprep.subr.bf16.mxu0 0
        %789 = vmatpush1.bf16.msra.mxu0 0
        %790 = vmatprep.subr.bf16.mxu0 0
        %791 = vmatpush1.bf16.msra.mxu0 0
        %792 = vmatprep.subr.bf16.mxu0 0
        %793 = vmatpush1.bf16.msra.mxu0 0
        %794 = vmatprep.subr.bf16.mxu0 0
        %795 = vmatpush1.bf16.msra.mxu0 0
        %796 = vmatprep.subr.bf16.mxu0 0
        %797 = vmatpush1.bf16.msra.mxu0 0
        %798 = vmatprep.subr.bf16.mxu0 0
        %799 = vmatpush1.bf16.msra.mxu0 0
        %800 = vmatprep.subr.bf16.mxu0 0
        %801 = vmatpush1.bf16.msra.mxu0 0
        %802 = vmatprep.subr.bf16.mxu0 0
        %803 = vmatpush1.bf16.msra.mxu0 0
        %804 = vmatprep.mubr.bf16.mxu0 0
        %805 = vmatmul.mubr.bf16.gmra.mrb[0].mxu0 %v767
        %v806 = vpop.f32.mrb[0].mxu0
        %v807 = vadd.f32 0.0, %v806
        %v808 = vpop.f32.mrb[0].mxu0
        %v809 = vpop.f32.mrb[0].mxu0
        %v810 = vpop.f32.mrb[0].mxu0
        %811 = vdwg.mxu0
        %v812 = vpack.c.bf16 %v807, %v807
        %s813 = scalar_lea.vmem %s7, 4
        %v814 = vld [vmem:[%s813] sm:$0xf]
        %v816 = vsel %vm591, %v812, 0
        %v819 = vsel %vm653, %v814, 0
        %821 = vmatprep.subr.bf16.mxu0 0
        %822 = vmatpush1.bf16.msra.mxu0 %v819
        %823 = vmatprep.subr.bf16.mxu0 0
        %824 = vmatpush1.bf16.msra.mxu0 0
        %825 = vmatprep.subr.bf16.mxu0 0
        %826 = vmatpush1.bf16.msra.mxu0 0
        %827 = vmatprep.subr.bf16.mxu0 0
        %828 = vmatpush1.bf16.msra.mxu0 0
        %829 = vmatprep.subr.bf16.mxu0 0
        %830 = vmatpush1.bf16.msra.mxu0 0
        %831 = vmatprep.subr.bf16.mxu0 0
        %832 = vmatpush1.bf16.msra.mxu0 0
        %833 = vmatprep.subr.bf16.mxu0 0
        %834 = vmatpush1.bf16.msra.mxu0 0
        %835 = vmatprep.subr.bf16.mxu0 0
        %836 = vmatpush1.bf16.msra.mxu0 0
        %837 = vmatprep.subr.bf16.mxu0 0
        %838 = vmatpush1.bf16.msra.mxu0 0
        %839 = vmatprep.subr.bf16.mxu0 0
        %840 = vmatpush1.bf16.msra.mxu0 0
        %841 = vmatprep.subr.bf16.mxu0 0
        %842 = vmatpush1.bf16.msra.mxu0 0
        %843 = vmatprep.subr.bf16.mxu0 0
        %844 = vmatpush1.bf16.msra.mxu0 0
        %845 = vmatprep.subr.bf16.mxu0 0
        %846 = vmatpush1.bf16.msra.mxu0 0
        %847 = vmatprep.subr.bf16.mxu0 0
        %848 = vmatpush1.bf16.msra.mxu0 0
        %849 = vmatprep.subr.bf16.mxu0 0
        %850 = vmatpush1.bf16.msra.mxu0 0
        %851 = vmatprep.subr.bf16.mxu0 0
        %852 = vmatpush1.bf16.msra.mxu0 0
        %853 = vmatprep.mubr.bf16.mxu0 0
        %854 = vmatmul.mubr.bf16.gmra.mrb[0].mxu0 %v816
        %v855 = vpop.f32.mrb[0].mxu0
        %v856 = vadd.f32 0.0, %v855
        %v857 = vpop.f32.mrb[0].mxu0
        %v858 = vpop.f32.mrb[0].mxu0
        %v859 = vpop.f32.mrb[0].mxu0
        %860 = vdwg.mxu0
        %v862 = vsel %vm591, %v697, 0
        %v865 = vsel %vm653, %v698, 0
        %867 = vmatprep.subr.bf16.mxu0 0
        %868 = vmatpush1.bf16.msra.mxu0 %v865
        %869 = vmatprep.subr.bf16.mxu0 0
        %870 = vmatpush1.bf16.msra.mxu0 0
        %871 = vmatprep.subr.bf16.mxu0 0
        %872 = vmatpush1.bf16.msra.mxu0 0
        %873 = vmatprep.subr.bf16.mxu0 0
        %874 = vmatpush1.bf16.msra.mxu0 0
        %875 = vmatprep.subr.bf16.mxu0 0
        %876 = vmatpush1.bf16.msra.mxu0 0
        %877 = vmatprep.subr.bf16.mxu0 0
        %878 = vmatpush1.bf16.msra.mxu0 0
        %879 = vmatprep.subr.bf16.mxu0 0
        %880 = vmatpush1.bf16.msra.mxu0 0
        %881 = vmatprep.subr.bf16.mxu0 0
        %882 = vmatpush1.bf16.msra.mxu0 0
        %883 = vmatprep.subr.bf16.mxu0 0
        %884 = vmatpush1.bf16.msra.mxu0 0
        %885 = vmatprep.subr.bf16.mxu0 0
        %886 = vmatpush1.bf16.msra.mxu0 0
        %887 = vmatprep.subr.bf16.mxu0 0
        %888 = vmatpush1.bf16.msra.mxu0 0
        %889 = vmatprep.subr.bf16.mxu0 0
        %890 = vmatpush1.bf16.msra.mxu0 0
        %891 = vmatprep.subr.bf16.mxu0 0
        %892 = vmatpush1.bf16.msra.mxu0 0
        %893 = vmatprep.subr.bf16.mxu0 0
        %894 = vmatpush1.bf16.msra.mxu0 0
        %895 = vmatprep.subr.bf16.mxu0 0
        %896 = vmatpush1.bf16.msra.mxu0 0
        %897 = vmatprep.subr.bf16.mxu0 0
        %898 = vmatpush1.bf16.msra.mxu0 0
        %899 = vmatprep.mubr.bf16.mxu0 0
        %900 = vmatmul.mubr.bf16.gmra.mrb[0].mxu0 %v862
        %v901 = vpop.f32.mrb[0].mxu0
        %v902 = vadd.f32 %v856, %v901
        %v903 = vpop.f32.mrb[0].mxu0
        %v904 = vpop.f32.mrb[0].mxu0
        %v905 = vpop.f32.mrb[0].mxu0
        %906 = vdwg.mxu0
        %907 = vrot.lane.b32.xlu0 %v462, 112
        %v908 = vpop.permute.xlu0 %907
        %909 = vrot.lane.b32.xlu0 %v526, 112
        %v910 = vpop.permute.xlu0 %909
        %v912 = vsel %vm591, %v908, 0
        %v915 = vsel %vm591, %v910, 0
        %917 = vmatprep.subr.bf16.mxu0 0
        %918 = vmatpush1.bf16.xpose.msra.mxu0 %v915
        %919 = vmatprep.subr.bf16.mxu0 0
        %920 = vmatpush1.bf16.xpose.msra.mxu0 0
        %921 = vmatprep.subr.bf16.mxu0 0
        %922 = vmatpush1.bf16.xpose.msra.mxu0 0
        %923 = vmatprep.subr.bf16.mxu0 0
        %924 = vmatpush1.bf16.xpose.msra.mxu0 0
        %925 = vmatprep.subr.bf16.mxu0 0
        %926 = vmatpush1.bf16.xpose.msra.mxu0 0
        %927 = vmatprep.subr.bf16.mxu0 0
        %928 = vmatpush1.bf16.xpose.msra.mxu0 0
        %929 = vmatprep.subr.bf16.mxu0 0
        %930 = vmatpush1.bf16.xpose.msra.mxu0 0
        %931 = vmatprep.subr.bf16.mxu0 0
        %932 = vmatpush1.bf16.xpose.msra.mxu0 0
        %933 = vmatprep.subr.bf16.mxu0 0
        %934 = vmatpush1.bf16.xpose.msra.mxu0 0
        %935 = vmatprep.subr.bf16.mxu0 0
        %936 = vmatpush1.bf16.xpose.msra.mxu0 0
        %937 = vmatprep.subr.bf16.mxu0 0
        %938 = vmatpush1.bf16.xpose.msra.mxu0 0
        %939 = vmatprep.subr.bf16.mxu0 0
        %940 = vmatpush1.bf16.xpose.msra.mxu0 0
        %941 = vmatprep.subr.bf16.mxu0 0
        %942 = vmatpush1.bf16.xpose.msra.mxu0 0
        %943 = vmatprep.subr.bf16.mxu0 0
        %944 = vmatpush1.bf16.xpose.msra.mxu0 0
        %945 = vmatprep.subr.bf16.mxu0 0
        %946 = vmatpush1.bf16.xpose.msra.mxu0 0
        %947 = vmatprep.subr.bf16.mxu0 0
        %948 = vmatpush1.bf16.xpose.msra.mxu0 0
        %949 = vmatprep.mubr.bf16.mxu0 0
        %950 = vmatmul.mubr.bf16.gmra.mrb[0].mxu0 %v912
        %v951 = vpop.f32.mrb[0].mxu0
        %v952 = vadd.f32 0.0, %v951
        %v953 = vpop.f32.mrb[0].mxu0
        %v954 = vpop.f32.mrb[0].mxu0
        %v955 = vpop.f32.mrb[0].mxu0
        %956 = vdwg.mxu0
        %v957 = vsel %vm591, %v952, -inf
        %958 = vmax.xlane.f32.xlu0 %v957
        %v959 = vpop.xlane.xlu0 %958
        %v960 = vsub.f32 %v952, %v959
        %v961 = vmul.f32 %v960, 1.442695
        %v962 = vpow.pop %v961
        %v963 = vsel %vm591, %v962, 0.0
        %964 = vadd.xlane.f32.xlu0 %v963
        %v965 = vpop.xlane.xlu0 %964
        %v966 = vrcp.pop %v965
        %v967 = vmul.f32 %v962, %v966
        %v968 = vpack.c.bf16 %v967, %v967
        %969 = vrot.lane.b32.xlu0 %v590, 112
        %v970 = vpop.permute.xlu0 %969
        %v972 = vsel %vm591, %v968, 0
        %v975 = vsel %vm653, %v970, 0
        %977 = vmatprep.subr.bf16.mxu0 0
        %978 = vmatpush1.bf16.msra.mxu0 %v975
        %979 = vmatprep.subr.bf16.mxu0 0
        %980 = vmatpush1.bf16.msra.mxu0 0
        %981 = vmatprep.subr.bf16.mxu0 0
        %982 = vmatpush1.bf16.msra.mxu0 0
        %983 = vmatprep.subr.bf16.mxu0 0
        %984 = vmatpush1.bf16.msra.mxu0 0
        %985 = vmatprep.subr.bf16.mxu0 0
        %986 = vmatpush1.bf16.msra.mxu0 0
        %987 = vmatprep.subr.bf16.mxu0 0
        %988 = vmatpush1.bf16.msra.mxu0 0
        %989 = vmatprep.subr.bf16.mxu0 0
        %990 = vmatpush1.bf16.msra.mxu0 0
        %991 = vmatprep.subr.bf16.mxu0 0
        %992 = vmatpush1.bf16.msra.mxu0 0
        %993 = vmatprep.subr.bf16.mxu0 0
        %994 = vmatpush1.bf16.msra.mxu0 0
        %995 = vmatprep.subr.bf16.mxu0 0
        %996 = vmatpush1.bf16.msra.mxu0 0
        %997 = vmatprep.subr.bf16.mxu0 0
        %998 = vmatpush1.bf16.msra.mxu0 0
        %999 = vmatprep.subr.bf16.mxu0 0
        %1000 = vmatpush1.bf16.msra.mxu0 0
        %1001 = vmatprep.subr.bf16.mxu0 0
        %1002 = vmatpush1.bf16.msra.mxu0 0
        %1003 = vmatprep.subr.bf16.mxu0 0
        %1004 = vmatpush1.bf16.msra.mxu0 0
        %1005 = vmatprep.subr.bf16.mxu0 0
        %1006 = vmatpush1.bf16.msra.mxu0 0
        %1007 = vmatprep.subr.bf16.mxu0 0
        %1008 = vmatpush1.bf16.msra.mxu0 0
        %1009 = vmatprep.mubr.bf16.mxu0 0
        %1010 = vmatmul.mubr.bf16.gmra.mrb[0].mxu0 %v972
        %v1011 = vpop.f32.mrb[0].mxu0
        %v1012 = vadd.f32 0.0, %v1011
        %v1013 = vpop.f32.mrb[0].mxu0
        %v1014 = vpop.f32.mrb[0].mxu0
        %v1015 = vpop.f32.mrb[0].mxu0
        %1016 = vdwg.mxu0
        %v1017 = vpack.c.bf16 %v1012, %v1012
        %s1018 = scalar_lea.vmem %s7, 8
        %v1019 = vld [vmem:[%s1018] sm:$0xf]
        %v1021 = vsel %vm591, %v1017, 0
        %v1024 = vsel %vm653, %v1019, 0
        %1026 = vmatprep.subr.bf16.mxu0 0
        %1027 = vmatpush1.bf16.msra.mxu0 %v1024
        %1028 = vmatprep.subr.bf16.mxu0 0
        %1029 = vmatpush1.bf16.msra.mxu0 0
        %1030 = vmatprep.subr.bf16.mxu0 0
        %1031 = vmatpush1.bf16.msra.mxu0 0
        %1032 = vmatprep.subr.bf16.mxu0 0
        %1033 = vmatpush1.bf16.msra.mxu0 0
        %1034 = vmatprep.subr.bf16.mxu0 0
        %1035 = vmatpush1.bf16.msra.mxu0 0
        %1036 = vmatprep.subr.bf16.mxu0 0
        %1037 = vmatpush1.bf16.msra.mxu0 0
        %1038 = vmatprep.subr.bf16.mxu0 0
        %1039 = vmatpush1.bf16.msra.mxu0 0
        %1040 = vmatprep.subr.bf16.mxu0 0
        %1041 = vmatpush1.bf16.msra.mxu0 0
        %1042 = vmatprep.subr.bf16.mxu0 0
        %1043 = vmatpush1.bf16.msra.mxu0 0
        %1044 = vmatprep.subr.bf16.mxu0 0
        %1045 = vmatpush1.bf16.msra.mxu0 0
        %1046 = vmatprep.subr.bf16.mxu0 0
        %1047 = vmatpush1.bf16.msra.mxu0 0
        %1048 = vmatprep.subr.bf16.mxu0 0
        %1049 = vmatpush1.bf16.msra.mxu0 0
        %1050 = vmatprep.subr.bf16.mxu0 0
        %1051 = vmatpush1.bf16.msra.mxu0 0
        %1052 = vmatprep.subr.bf16.mxu0 0
        %1053 = vmatpush1.bf16.msra.mxu0 0
        %1054 = vmatprep.subr.bf16.mxu0 0
        %1055 = vmatpush1.bf16.msra.mxu0 0
        %1056 = vmatprep.subr.bf16.mxu0 0
        %1057 = vmatpush1.bf16.msra.mxu0 0
        %1058 = vmatprep.mubr.bf16.mxu0 0
        %1059 = vmatmul.mubr.bf16.gmra.mrb[0].mxu0 %v1021
        %v1060 = vpop.f32.mrb[0].mxu0
        %v1061 = vadd.f32 0.0, %v1060
        %v1062 = vpop.f32.mrb[0].mxu0
        %v1063 = vpop.f32.mrb[0].mxu0
        %v1064 = vpop.f32.mrb[0].mxu0
        %1065 = vdwg.mxu0
        %v1066 = vadd.f32 %v902, %v1061
        %1067 = vrot.lane.b32.xlu0 %v462, 104
        %v1068 = vpop.permute.xlu0 %1067
        %1069 = vrot.lane.b32.xlu0 %v526, 104
        %v1070 = vpop.permute.xlu0 %1069
        %v1072 = vsel %vm591, %v1068, 0
        %v1075 = vsel %vm591, %v1070, 0
        %1077 = vmatprep.subr.bf16.mxu0 0
        %1078 = vmatpush1.bf16.xpose.msra.mxu0 %v1075
        %1079 = vmatprep.subr.bf16.mxu0 0
        %1080 = vmatpush1.bf16.xpose.msra.mxu0 0
        %1081 = vmatprep.subr.bf16.mxu0 0
        %1082 = vmatpush1.bf16.xpose.msra.mxu0 0
        %1083 = vmatprep.subr.bf16.mxu0 0
        %1084 = vmatpush1.bf16.xpose.msra.mxu0 0
        %1085 = vmatprep.subr.bf16.mxu0 0
        %1086 = vmatpush1.bf16.xpose.msra.mxu0 0
        %1087 = vmatprep.subr.bf16.mxu0 0
        %1088 = vmatpush1.bf16.xpose.msra.mxu0 0
        %1089 = vmatprep.subr.bf16.mxu0 0
        %1090 = vmatpush1.bf16.xpose.msra.mxu0 0
        %1091 = vmatprep.subr.bf16.mxu0 0
        %1092 = vmatpush1.bf16.xpose.msra.mxu0 0
        %1093 = vmatprep.subr.bf16.mxu0 0
        %1094 = vmatpush1.bf16.xpose.msra.mxu0 0
        %1095 = vmatprep.subr.bf16.mxu0 0
        %1096 = vmatpush1.bf16.xpose.msra.mxu0 0
        %1097 = vmatprep.subr.bf16.mxu0 0
        %1098 = vmatpush1.bf16.xpose.msra.mxu0 0
        %1099 = vmatprep.subr.bf16.mxu0 0
        %1100 = vmatpush1.bf16.xpose.msra.mxu0 0
        %1101 = vmatprep.subr.bf16.mxu0 0
        %1102 = vmatpush1.bf16.xpose.msra.mxu0 0
        %1103 = vmatprep.subr.bf16.mxu0 0
        %1104 = vmatpush1.bf16.xpose.msra.mxu0 0
        %1105 = vmatprep.subr.bf16.mxu0 0
        %1106 = vmatpush1.bf16.xpose.msra.mxu0 0
        %1107 = vmatprep.subr.bf16.mxu0 0
        %1108 = vmatpush1.bf16.xpose.msra.mxu0 0
        %1109 = vmatprep.mubr.bf16.mxu0 0
        %1110 = vmatmul.mubr.bf16.gmra.mrb[0].mxu0 %v1072
        %v1111 = vpop.f32.mrb[0].mxu0
        %v1112 = vadd.f32 0.0, %v1111
        %v1113 = vpop.f32.mrb[0].mxu0
        %v1114 = vpop.f32.mrb[0].mxu0
        %v1115 = vpop.f32.mrb[0].mxu0
        %1116 = vdwg.mxu0
        %v1117 = vsel %vm591, %v1112, -inf
        %1118 = vmax.xlane.f32.xlu0 %v1117
        %v1119 = vpop.xlane.xlu0 %1118
        %v1120 = vsub.f32 %v1112, %v1119
        %v1121 = vmul.f32 %v1120, 1.442695
        %v1122 = vpow.pop %v1121
        %v1123 = vsel %vm591, %v1122, 0.0
        %1124 = vadd.xlane.f32.xlu0 %v1123
        %v1125 = vpop.xlane.xlu0 %1124
        %v1126 = vrcp.pop %v1125
        %v1127 = vmul.f32 %v1122, %v1126
        %v1128 = vpack.c.bf16 %v1127, %v1127
        %1129 = vrot.lane.b32.xlu0 %v590, 104
        %v1130 = vpop.permute.xlu0 %1129
        %v1132 = vsel %vm591, %v1128, 0
        %v1135 = vsel %vm653, %v1130, 0
        %1137 = vmatprep.subr.bf16.mxu0 0
        %1138 = vmatpush1.bf16.msra.mxu0 %v1135
        %1139 = vmatprep.subr.bf16.mxu0 0
        %1140 = vmatpush1.bf16.msra.mxu0 0
        %1141 = vmatprep.subr.bf16.mxu0 0
        %1142 = vmatpush1.bf16.msra.mxu0 0
        %1143 = vmatprep.subr.bf16.mxu0 0
        %1144 = vmatpush1.bf16.msra.mxu0 0
        %1145 = vmatprep.subr.bf16.mxu0 0
        %1146 = vmatpush1.bf16.msra.mxu0 0
        %1147 = vmatprep.subr.bf16.mxu0 0
        %1148 = vmatpush1.bf16.msra.mxu0 0
        %1149 = vmatprep.subr.bf16.mxu0 0
        %1150 = vmatpush1.bf16.msra.mxu0 0
        %1151 = vmatprep.subr.bf16.mxu0 0
        %1152 = vmatpush1.bf16.msra.mxu0 0
        %1153 = vmatprep.subr.bf16.mxu0 0
        %1154 = vmatpush1.bf16.msra.mxu0 0
        %1155 = vmatprep.subr.bf16.mxu0 0
        %1156 = vmatpush1.bf16.msra.mxu0 0
        %1157 = vmatprep.subr.bf16.mxu0 0
        %1158 = vmatpush1.bf16.msra.mxu0 0
        %1159 = vmatprep.subr.bf16.mxu0 0
        %1160 = vmatpush1.bf16.msra.mxu0 0
        %1161 = vmatprep.subr.bf16.mxu0 0
        %1162 = vmatpush1.bf16.msra.mxu0 0
        %1163 = vmatprep.subr.bf16.mxu0 0
        %1164 = vmatpush1.bf16.msra.mxu0 0
        %1165 = vmatprep.subr.bf16.mxu0 0
        %1166 = vmatpush1.bf16.msra.mxu0 0
        %1167 = vmatprep.subr.bf16.mxu0 0
        %1168 = vmatpush1.bf16.msra.mxu0 0
        %1169 = vmatprep.mubr.bf16.mxu0 0
        %1170 = vmatmul.mubr.bf16.gmra.mrb[0].mxu0 %v1132
        %v1171 = vpop.f32.mrb[0].mxu0
        %v1172 = vadd.f32 0.0, %v1171
        %v1173 = vpop.f32.mrb[0].mxu0
        %v1174 = vpop.f32.mrb[0].mxu0
        %v1175 = vpop.f32.mrb[0].mxu0
        %1176 = vdwg.mxu0
        %v1177 = vpack.c.bf16 %v1172, %v1172
        %s1178 = scalar_lea.vmem %s7, 12
        %v1179 = vld [vmem:[%s1178] sm:$0xf]
        %v1181 = vsel %vm591, %v1177, 0
        %v1184 = vsel %vm653, %v1179, 0
        %1186 = vmatprep.subr.bf16.mxu0 0
        %1187 = vmatpush1.bf16.msra.mxu0 %v1184
        %1188 = vmatprep.subr.bf16.mxu0 0
        %1189 = vmatpush1.bf16.msra.mxu0 0
        %1190 = vmatprep.subr.bf16.mxu0 0
        %1191 = vmatpush1.bf16.msra.mxu0 0
        %1192 = vmatprep.subr.bf16.mxu0 0
        %1193 = vmatpush1.bf16.msra.mxu0 0
        %1194 = vmatprep.subr.bf16.mxu0 0
        %1195 = vmatpush1.bf16.msra.mxu0 0
        %1196 = vmatprep.subr.bf16.mxu0 0
        %1197 = vmatpush1.bf16.msra.mxu0 0
        %1198 = vmatprep.subr.bf16.mxu0 0
        %1199 = vmatpush1.bf16.msra.mxu0 0
        %1200 = vmatprep.subr.bf16.mxu0 0
        %1201 = vmatpush1.bf16.msra.mxu0 0
        %1202 = vmatprep.subr.bf16.mxu0 0
        %1203 = vmatpush1.bf16.msra.mxu0 0
        %1204 = vmatprep.subr.bf16.mxu0 0
        %1205 = vmatpush1.bf16.msra.mxu0 0
        %1206 = vmatprep.subr.bf16.mxu0 0
        %1207 = vmatpush1.bf16.msra.mxu0 0
        %1208 = vmatprep.subr.bf16.mxu0 0
        %1209 = vmatpush1.bf16.msra.mxu0 0
        %1210 = vmatprep.subr.bf16.mxu0 0
        %1211 = vmatpush1.bf16.msra.mxu0 0
        %1212 = vmatprep.subr.bf16.mxu0 0
        %1213 = vmatpush1.bf16.msra.mxu0 0
        %1214 = vmatprep.subr.bf16.mxu0 0
        %1215 = vmatpush1.bf16.msra.mxu0 0
        %1216 = vmatprep.subr.bf16.mxu0 0
        %1217 = vmatpush1.bf16.msra.mxu0 0
        %1218 = vmatprep.mubr.bf16.mxu0 0
        %1219 = vmatmul.mubr.bf16.gmra.mrb[0].mxu0 %v1181
        %v1220 = vpop.f32.mrb[0].mxu0
        %v1221 = vadd.f32 0.0, %v1220
        %v1222 = vpop.f32.mrb[0].mxu0
        %v1223 = vpop.f32.mrb[0].mxu0
        %v1224 = vpop.f32.mrb[0].mxu0
        %1225 = vdwg.mxu0
        %v1226 = vadd.f32 %v1066, %v1221
        %v1227 = vld [vmem:[%s8] sm:$0x1]
        %v1229 = vlaneseq
        %v1230 = vshrl.u32 %v1229, 7
        %v1231 = vsub.s32 0, %v1230
        %v1232 = vrot.slane %v1227, %v1231
        %v1234 = vadd.f32 %v1226, %v1232
        %1235 = vst.msk [vmem:[%s391] sm:$0xff] %vm418, %v1234
        %s1236 = sand.u32 %s230, 1
        %s1237 = scalar_lea.sflag [#allocation4], %s1236
        %s1238 = sand.u32 %s230, 1
        %s1239 = smul.addr %s1238, 8
        %s1240 = scalar_lea.vmem [#allocation10], %s1239
        // Predicated region
        $region73: #{tpu_custom_call.1} parent=55 // pred_check
          %p1241 = pneg %p240
        $region74: #{tpu_custom_call.1} parent=55 // pred_check_branch
          %1243 = sbr.rel (%p1241) target = $region76
        $region75: #{tpu_custom_call.1} parent=55 // pred_region
          %s1245 = ssub.s32 128, 128
          %1246 = vsyncadd %s1237, %s1245
          %s1247 = smul.addr %s28, 128
          %s1248 = scalar_lea.hbm %s9, %s1247
          %s1250 = sshll.u32 %s1240, 4
          %s1251 = int_to_ptr.vmem [resolvable:$true] %s1250
          %1253 = dma.vmem_to_hbm [thread:$0]  %s1251, 128, %s1248, %s1237
        $region76: #{tpu_custom_call.1} parent=55 // pred_fallthru
          _
      $region56: #{tpu_custom_call.1} parent=5 // pred_fallthru
        _
      %p1254 = scmp.le.s32.totalorder 2, %s23
      // Predicated region
      $region77: #{tpu_custom_call.1} parent=5 // pred_check
        %p1255 = pneg %p1254
      $region78: #{tpu_custom_call.1} parent=5 // pred_check_branch
        %1257 = sbr.rel (%p1255) target = $region80
      $region79: #{tpu_custom_call.1} parent=5 // pred_region
        %s1258 = ssub.s32 %s23, 2
        // Predicated region
        $region81: #{tpu_custom_call.1} parent=79 // pred_check
          %p1259 = pneg %p246
        $region82: #{tpu_custom_call.1} parent=79 // pred_check_branch
          %1261 = sbr.rel (%p1259) target = $region84
        $region83: #{tpu_custom_call.1} parent=79 // pred_region
          %s1262 = sand.u32 %s231, 1
          %s1263 = scalar_lea.sflag [#allocation4], %s1262
          %s1264 = sand.u32 %s231, 1
          %s1265 = smul.addr %s1264, 8
          %s1266 = scalar_lea.vmem [#allocation10], %s1265
          %1267 = dma.done %s1263, 128
        $region84: #{tpu_custom_call.1} parent=79 // pred_fallthru
          _
      $region80: #{tpu_custom_call.1} parent=5 // pred_fallthru
        _
    $region6: #{tpu_custom_call.1} parent=1 // loop_footer
      %s27 = sadd.s32 1, %s23
    $region7: #{tpu_custom_call.1} parent=1 // loop_footer_branch
      %22 = sbr.rel target = $region3
    $region8: #{tpu_custom_call.1} parent=1 // loop_exit
      _
    %1268 = vsyncpa [#allocation3], 1
    %s1269 = scalar_lea.sflag [#allocation3], 1
    %1270 = vsyncpa %s1269, 1
    %1271 = vsyncpa [#allocation6], 1
    %1272 = vsyncpa [#allocation9], 1
    %1273 = vsyncpa [#allocation4], 1
    %s1274 = scalar_lea.sflag [#allocation4], 1
    %1275 = vsyncpa %s1274, 1

</llo_original>
